<compile_context>
chip_gen: v7x
topology: tpu7x:2x2x1
jax: 0.10.0
libtpu: 0.0.40
codegen_flags: <defaults>
</compile_context>

<pallas_src>
import functools
import math

import jax
import jax.numpy as jnp
from jax import lax
from jax.experimental import pallas as pl
from jax.experimental.pallas import tpu as pltpu

LN_EPS = 1e-5  # torch.nn.LayerNorm default


# ---------------------------------------------------------------------------
# in-kernel helpers (register values, f32)
# ---------------------------------------------------------------------------
def _layernorm(x, gamma, beta):
    mean = jnp.mean(x, axis=-1, keepdims=True)
    var = jnp.mean(jnp.square(x - mean), axis=-1, keepdims=True)
    return (x - mean) * lax.rsqrt(var + LN_EPS) * gamma + beta


def _gelu_exact(x):
    # torch.nn.GELU(approximate='none')
    return 0.5 * x * (1.0 + lax.erf(x * (1.0 / math.sqrt(2.0))))


def _nbytes(*arrs):
    return sum(int(a.size) * a.dtype.itemsize for a in arrs)


def _pick_tile(total, preferred):
    """Largest tile <= preferred that divides `total` and is a multiple of 128,
    falling back to the full extent (which always satisfies the (8,128) rule)."""
    if total <= preferred:
        return total
    t = (preferred // 128) * 128
    while t >= 128:
        if total % t == 0:
            return t
        t -= 128
    return total


def _pick_tq(n, heads):
    """Query-row tile: 256/128-aligned, sized so attention intermediates
    (scores f32 + exp f32 + exp bf16) stay well inside 64 MiB-class VMEM."""
    budget = 24 << 20
    for cand in (512, 256, 128):
        if n % cand == 0 and heads * cand * n * 12 <= budget:
            return cand
    return _pick_tile(n, 128)


def _vmem_cap_bytes():
    try:
        return int(pltpu.get_tpu_info().vmem_capacity_bytes)
    except Exception:  # pragma: no cover - conservative fallback (v7x-sized)
        return 64 << 20


def _vmem_limit(request_bytes):
    """Generation-aware scoped-VMEM limit with headroom for compiler scratch."""
    cap = _vmem_cap_bytes()
    ceiling = max(cap - (12 << 20), 16 << 20)
    return int(min(max(int(request_bytes), 32 << 20), ceiling))


# ---------------------------------------------------------------------------
# Fused transformer layer kernel:
#   x1 = to_out(attn(LN(x))) + x ;  y = W2(GELU(W1(LN(x1)))) + x1
# Attention + FF are tiled over query rows inside the kernel.
# ---------------------------------------------------------------------------
def _layer_kernel(x_ref, ag_ref, ab_ref, wqkv_ref, nk_ref, nv_ref, wo_ref,
                  fg_ref, fb_ref, w1_ref, w2_ref, o_ref, q_scratch,
                  *, heads, dim_head, scale, tq):
    bf16 = jnp.bfloat16
    n = x_ref.shape[1]
    inner = heads * dim_head
    nq = n // tq

    x = x_ref[0]                                               # (N, D) f32
    xn = _layernorm(x, ag_ref[0], ab_ref[0])

    # ---- fused QKV projection: ONE full-width MXU pass (N, D) @ (D, 3*inner)
    qkv = jnp.dot(xn.astype(bf16), wqkv_ref[...],
                  preferred_element_type=jnp.float32)          # (N, 3*inner) f32

    # split into head-major (H, N, dh) stacks: static lane slices + major stack
    def head_stack(base):
        return jnp.stack(
            [qkv[:, base + h * dim_head: base + (h + 1) * dim_head]
             for h in range(heads)], axis=0)

    q_scratch[...] = (head_stack(0) * scale).astype(bf16)      # (H, N, dh)
    k3 = head_stack(inner).astype(bf16)                        # (H, N, dh)
    v3 = head_stack(2 * inner).astype(bf16)                    # (H, N, dh)

    nk = nk_ref[...]                                           # (H, nn, dh) bf16
    nv = nv_ref[...]
    wo = wo_ref[...]                                           # (inner, D) bf16
    w1 = w1_ref[...]
    w2 = w2_ref[...]
    fg = fg_ref[0]
    fb = fb_ref[0]

    aligned = (tq % 128 == 0)

    def body(i, carry):
        start = i * tq
        if aligned:
            start = pl.multiple_of(start, 128)
        qt = q_scratch[:, pl.ds(start, tq), :]                 # (H, tq, dh) bf16

        # scores vs. sequence keys and the per-head null keys
        s_seq = jnp.einsum('hik,hjk->hij', qt, k3,
                           preferred_element_type=jnp.float32)  # (H, tq, N)
        s_nul = jnp.einsum('hik,hjk->hij', qt, nk,
                           preferred_element_type=jnp.float32)  # (H, tq, nn)

        # joint softmax over [null ++ seq] without a seq-axis concat
        m = jnp.maximum(jnp.max(s_seq, axis=-1, keepdims=True),
                        jnp.max(s_nul, axis=-1, keepdims=True))
        e_seq = jnp.exp(s_seq - m)
        e_nul = jnp.exp(s_nul - m)
        den = (jnp.sum(e_seq, axis=-1, keepdims=True)
               + jnp.sum(e_nul, axis=-1, keepdims=True))

        ctx = (jnp.einsum('hij,hjk->hik', e_seq.astype(bf16), v3,
                          preferred_element_type=jnp.float32)
               + jnp.einsum('hij,hjk->hik', e_nul.astype(bf16), nv,
                            preferred_element_type=jnp.float32))  # (H, tq, dh)
        ctx = ctx * pl.reciprocal(den, approx=True)

        # merge heads (minor-dim concat) -> single (tq, inner)@(inner, D) dot
        ctx2 = jnp.concatenate([ctx[h] for h in range(heads)], axis=-1)
        out_t = jnp.dot(ctx2.astype(bf16), wo,
                        preferred_element_type=jnp.float32)      # (tq, D)

        x_t = x_ref[0, pl.ds(start, tq), :]
        x1_t = out_t + x_t

        # ---- feed-forward on the same row tile
        x1n = _layernorm(x1_t, fg, fb)
        h1 = jnp.dot(x1n.astype(bf16), w1,
                     preferred_element_type=jnp.float32)          # (tq, ff)
        h1 = _gelu_exact(h1)
        y_t = jnp.dot(h1.astype(bf16), w2,
                      preferred_element_type=jnp.float32) + x1_t
        o_ref[0, pl.ds(start, tq), :] = y_t
        return carry

    lax.fori_loop(0, nq, body, 0)


def transformer_layer(x, lp, *, heads, dim_head):
    B, N, D = (int(s) for s in x.shape)
    inner = heads * dim_head
    ff_inner = int(lp["w1"].shape[1])
    nn_kv = int(lp["nk"].shape[1])
    scale = dim_head ** (-0.5)
    tq = _pick_tq(N, heads)

    weight_bytes = _nbytes(lp["wqkv"], lp["nk"], lp["nv"], lp["wout"],
                           lp["w1"], lp["w2"], lp["attn_gamma"], lp["attn_beta"],
                           lp["ff_gamma"], lp["ff_beta"])
    io_block_bytes = 2 * N * D * 4                       # x block + out block
    intermediates = (
        N * D * 4                                        # LN(x)
        + N * 3 * inner * 4                              # fused QKV (f32)
        + 3 * heads * N * dim_head * 2                   # q/k/v head stacks bf16
        + heads * tq * (N + 128) * 4 * 2                 # scores + exp (f32)
        + heads * tq * N * 2                             # exp (bf16 copy)
        + heads * tq * dim_head * 4 * 2                  # ctx
        + tq * inner * (4 + 2)                           # merged ctx
        + tq * D * 4 * 4                                 # out / x1 / x1n / y
        + tq * ff_inner * (4 + 2)                        # FF hidden
    )
    # 2x: blocks (incl. constant-index-map weights) are double-buffered.
    request = 2 * (weight_bytes + io_block_bytes) + intermediates + (4 << 20)
    vmem_limit = _vmem_limit(request)

    flops = B * (2 * N * D * 3 * inner                   # fused QKV
                 + 4 * N * (N + nn_kv) * inner           # scores + ctx
                 + 2 * N * inner * D                     # out projection
                 + 4 * N * D * ff_inner)                 # two FF matmuls
    transcendentals = B * (heads * N * (N + nn_kv) + N * ff_inner)
    bytes_accessed = weight_bytes + B * (2 * N * D * 4)

    kern = functools.partial(_layer_kernel, heads=heads, dim_head=dim_head,
                             scale=scale, tq=tq)
    const2 = lambda b: (0, 0)
    const3 = lambda b: (0, 0, 0)

    return pl.pallas_call(
        kern,
        out_shape=jax.ShapeDtypeStruct((B, N, D), jnp.float32),
        grid_spec=pltpu.PrefetchScalarGridSpec(
            num_scalar_prefetch=0,
            grid=(B,),
            in_specs=[
                pl.BlockSpec((1, N, D), lambda b: (b, 0, 0)),          # x
                pl.BlockSpec((1, D), const2),                          # attn gamma
                pl.BlockSpec((1, D), const2),                          # attn beta
                pl.BlockSpec((D, 3 * inner), const2),                  # fused Wqkv
                pl.BlockSpec((heads, nn_kv, dim_head), const3),        # null k
                pl.BlockSpec((heads, nn_kv, dim_head), const3),        # null v
                pl.BlockSpec((inner, D), const2),                      # Wout
                pl.BlockSpec((1, D), const2),                          # ff gamma
                pl.BlockSpec((1, D), const2),                          # ff beta
                pl.BlockSpec((D, ff_inner), const2),                   # W1
                pl.BlockSpec((ff_inner, D), const2),                   # W2
            ],
            out_specs=pl.BlockSpec((1, N, D), lambda b: (b, 0, 0)),
            scratch_shapes=[pltpu.VMEM((heads, N, dim_head), jnp.bfloat16)],
        ),
        compiler_params=pltpu.CompilerParams(
            dimension_semantics=("parallel",),
            vmem_limit_bytes=vmem_limit),
        cost_estimate=pl.CostEstimate(flops=int(flops),
                                      transcendentals=int(transcendentals),
                                      bytes_accessed=int(bytes_accessed)),
    )(x, lp["attn_gamma"], lp["attn_beta"], lp["wqkv"], lp["nk"], lp["nv"],
      lp["wout"], lp["ff_gamma"], lp["ff_beta"], lp["w1"], lp["w2"])


# ---------------------------------------------------------------------------
# Output head kernel:  logits = LN(x) @ W_logits
# ---------------------------------------------------------------------------
def _head_kernel(x_ref, g_ref, b_ref, wl_ref, o_ref):
    xn = _layernorm(x_ref[0], g_ref[0], b_ref[0])
    o_ref[0] = jnp.dot(xn.astype(jnp.bfloat16), wl_ref[...],
                       preferred_element_type=jnp.float32).astype(o_ref.dtype)


def logits_head(x, gamma, beta, wl_t, *, out_dtype=jnp.float32):
    B, N, D = (int(s) for s in x.shape)
    V = int(wl_t.shape[1])
    tn = _pick_tile(N, 512)
    out_itemsize = jnp.dtype(out_dtype).itemsize
    wl_bytes = D * V * wl_t.dtype.itemsize

    # Keep the whole codebook weight resident whenever it is small enough;
    # otherwise tile the vocab with that axis OUTERMOST so each weight tile is
    # streamed only V/tv times (not B*N/tn times).
    tv = V if wl_bytes <= (16 << 20) else _pick_tile(V, 2048)
    nvt = V // tv

    if nvt == 1:
        grid = (B, N // tn)
        in_specs = [
            pl.BlockSpec((1, tn, D), lambda b, n: (b, n, 0)),
            pl.BlockSpec((1, D), lambda b, n: (0, 0)),
            pl.BlockSpec((1, D), lambda b, n: (0, 0)),
            pl.BlockSpec((D, V), lambda b, n: (0, 0)),       # resident weight
        ]
        out_specs = pl.BlockSpec((1, tn, V), lambda b, n: (b, n, 0))
        dims = ("parallel", "parallel")
    else:
        grid = (nvt, B, N // tn)                             # vocab outermost
        in_specs = [
            pl.BlockSpec((1, tn, D), lambda v, b, n: (b, n, 0)),
            pl.BlockSpec((1, D), lambda v, b, n: (0, 0)),
            pl.BlockSpec((1, D), lambda v, b, n: (0, 0)),
            pl.BlockSpec((D, tv), lambda v, b, n: (0, v)),
        ]
        out_specs = pl.BlockSpec((1, tn, tv), lambda v, b, n: (b, n, v))
        dims = ("parallel", "parallel", "parallel")

    request = (2 * (tn * D * 4 + D * tv * 2 + tn * tv * out_itemsize)
               + tn * D * (4 + 2) + tn * tv * 4
               + _nbytes(gamma, beta) + (2 << 20))
    vmem_limit = _vmem_limit(request)

    flops = 2 * B * N * D * V
    bytes_accessed = _nbytes(x, wl_t, gamma, beta) + B * N * V * out_itemsize

    return pl.pallas_call(
        _head_kernel,
        out_shape=jax.ShapeDtypeStruct((B, N, V), out_dtype),
        grid_spec=pltpu.PrefetchScalarGridSpec(
            num_scalar_prefetch=0, grid=grid,
            in_specs=in_specs, out_specs=out_specs),
        compiler_params=pltpu.CompilerParams(
            dimension_semantics=dims, vmem_limit_bytes=vmem_limit),
        cost_estimate=pl.CostEstimate(flops=int(flops), transcendentals=0,
                                      bytes_accessed=int(bytes_accessed)),
    )(x, gamma, beta, wl_t)


# ---------------------------------------------------------------------------
# Parameters: deterministic, PyTorch-equivalent, pre-transposed / fused ONCE.
# ---------------------------------------------------------------------------
def init_params(key, *, vocab_size, dim, depth, max_len,
                heads, dim_head, num_null_kv, ff_mult):
    inner = heads * dim_head
    ff_inner = int(ff_mult * dim)
    bf16 = jnp.bfloat16
    keys = jax.random.split(key, depth + 4)

    params = {
        "tok_embeds": 0.02 * jax.random.normal(keys[0], (vocab_size + 1, dim), jnp.float32),
        "pos_embeds": 0.02 * jax.random.normal(keys[1], (max_len, dim), jnp.float32),
        "norm_out_gamma": jnp.ones((1, dim), jnp.float32),
        "norm_out_beta": jnp.zeros((1, dim), jnp.float32),
        # torch to_logits weight is (V, D); store pre-transposed (D, V) in bf16
        "to_logits": (0.02 * jax.random.normal(keys[2], (vocab_size, dim),
                                               jnp.float32)).T.astype(bf16),
        "layers": [],
    }
    for l in range(depth):
        lk = jax.random.split(keys[3 + l], 5)
        null_kv = jax.random.normal(lk[0], (heads, 2 * num_null_kv, dim_head), jnp.float32)
        wqkv = 0.02 * jax.random.normal(lk[1], (3 * inner, dim), jnp.float32)  # torch (out,in)
        wout = 0.02 * jax.random.normal(lk[2], (dim, inner), jnp.float32)
        w1 = 0.02 * jax.random.normal(lk[3], (ff_inner, dim), jnp.float32)
        w2 = 0.02 * jax.random.normal(lk[4], (dim, ff_inner), jnp.float32)

        params["layers"].append(dict(
            attn_gamma=jnp.ones((1, dim), jnp.float32),
            attn_beta=jnp.zeros((1, dim), jnp.float32),
            # fused QKV weight, pre-transposed to (D, 3*inner); column order
            # matches torch's chunk(3) + rearrange 'b n (h d) -> b h n d'
            wqkv=wqkv.T.astype(bf16),
            # deinterleave matches rearrange 'h (n r) d', r=2 + unbind(dim=-2)
            nk=null_kv[:, 0::2, :].astype(bf16),
            nv=null_kv[:, 1::2, :].astype(bf16),
            wout=wout.T.astype(bf16),            # (inner, D)
            ff_gamma=jnp.ones((1, dim), jnp.float32),
            ff_beta=jnp.zeros((1, dim), jnp.float32),
            w1=w1.T.astype(bf16),                # (D, ff_inner)
            w2=w2.T.astype(bf16),                # (ff_inner, D)
        ))
    return params


# ---------------------------------------------------------------------------
# MaskGIT.forward
# ---------------------------------------------------------------------------
def maskgit_forward(tokens, params, *, heads, dim_head, logits_dtype=jnp.float32):
    b = tokens.shape[0]
    spatial = tokens.shape[1:]
    flat = tokens.reshape(b, -1)                   # (B, N)
    n = flat.shape[1]

    # embedding gathers + positional add (plain-JAX glue)
    x = params["tok_embeds"][flat] + params["pos_embeds"][:n][None, :, :]

    # transformer encoder: one fused Pallas kernel per layer (attn + FF)
    for lp in params["layers"]:
        x = transformer_layer(x, lp, heads=heads, dim_head=dim_head)

    # final norm + to_logits (Pallas kernel, resident / vocab-outermost weight)
    logits = logits_head(x, params["norm_out_gamma"], params["norm_out_beta"],
                         params["to_logits"], out_dtype=logits_dtype)
    return logits.reshape(b, *spatial, logits.shape[-1])


if __name__ == "__main__":
    # small, module-consistent config
    vocab_size = 32
    dim = 32
    depth = 2
    max_len = 64
    heads = 2
    dim_head = 16
    num_null_kv = 2
    ff_mult = 4

    key = jax.random.PRNGKey(0)
    pkey, tkey = jax.random.split(key)

    params = init_params(pkey, vocab_size=vocab_size, dim=dim, depth=depth,
                         max_len=max_len, heads=heads, dim_head=dim_head,
                         num_null_kv=num_null_kv, ff_mult=ff_mult)

    # token grid: (B, H, W) of token ids -> flattened to seq of length 16
    tokens = jax.random.randint(tkey, (2, 4, 4), 0, vocab_size, dtype=jnp.int32)

    logits = maskgit_forward(tokens, params, heads=heads, dim_head=dim_head)
    logits = jax.block_until_ready(logits)

    assert logits.shape == (2, 4, 4, vocab_size), logits.shape
    assert logits.dtype == jnp.float32
    assert bool(jnp.all(jnp.isfinite(logits)))
    print("KERNEL_OK")
</pallas_src>

<mosaic_0001>
module attributes {stable_mosaic.version = 11 : i64} {
  func.func @_layer_kernel(%arg0: i32, %arg1: memref<1x16x32xf32, #tpu.memory_space<vmem>>, %arg2: memref<1x32xf32, #tpu.memory_space<vmem>>, %arg3: memref<1x32xf32, #tpu.memory_space<vmem>>, %arg4: memref<32x96xbf16, #tpu.memory_space<vmem>>, %arg5: memref<2x2x16xbf16, #tpu.memory_space<vmem>>, %arg6: memref<2x2x16xbf16, #tpu.memory_space<vmem>>, %arg7: memref<32x32xbf16, #tpu.memory_space<vmem>>, %arg8: memref<1x32xf32, #tpu.memory_space<vmem>>, %arg9: memref<1x32xf32, #tpu.memory_space<vmem>>, %arg10: memref<32x128xbf16, #tpu.memory_space<vmem>>, %arg11: memref<128x32xbf16, #tpu.memory_space<vmem>>, %arg12: memref<1x16x32xf32, #tpu.memory_space<vmem>>, %arg13: memref<2x16x16xbf16, #tpu.memory_space<vmem>>) attributes {dimension_semantics = [#tpu.dimension_semantics<parallel>], iteration_bounds = array<i64: 2>, scalar_prefetch = 0 : i64, scratch_operands = 1 : i64, tpu.core_type = #tpu.core_type<tc>, window_params = [{transform_indices = @transform_0, window_bounds = array<i64: 1, 16, 32>}, {pipeline_mode = #tpu.pipeline_mode<synchronous>, transform_indices = @transform_1, window_bounds = array<i64: 1, 32>}, {pipeline_mode = #tpu.pipeline_mode<synchronous>, transform_indices = @transform_2, window_bounds = array<i64: 1, 32>}, {pipeline_mode = #tpu.pipeline_mode<synchronous>, transform_indices = @transform_3, window_bounds = array<i64: 32, 96>}, {pipeline_mode = #tpu.pipeline_mode<synchronous>, transform_indices = @transform_4, window_bounds = array<i64: 2, 2, 16>}, {pipeline_mode = #tpu.pipeline_mode<synchronous>, transform_indices = @transform_5, window_bounds = array<i64: 2, 2, 16>}, {pipeline_mode = #tpu.pipeline_mode<synchronous>, transform_indices = @transform_6, window_bounds = array<i64: 32, 32>}, {pipeline_mode = #tpu.pipeline_mode<synchronous>, transform_indices = @transform_7, window_bounds = array<i64: 1, 32>}, {pipeline_mode = #tpu.pipeline_mode<synchronous>, transform_indices = @transform_8, window_bounds = array<i64: 1, 32>}, {pipeline_mode = #tpu.pipeline_mode<synchronous>, transform_indices = @transform_9, window_bounds = array<i64: 32, 128>}, {pipeline_mode = #tpu.pipeline_mode<synchronous>, transform_indices = @transform_10, window_bounds = array<i64: 128, 32>}, {transform_indices = @transform_11, window_bounds = array<i64: 1, 16, 32>}]} {
    %c0 = arith.constant 0 : index
    %c0_0 = arith.constant 0 : index
    %c0_1 = arith.constant 0 : index
    %0 = vector.load %arg1[%c0, %c0_0, %c0_1] : memref<1x16x32xf32, #tpu.memory_space<vmem>>, vector<1x16x32xf32>
    %1 = vector.shape_cast %0 : vector<1x16x32xf32> to vector<16x32xf32>
    %c0_2 = arith.constant 0 : index
    %c0_3 = arith.constant 0 : index
    %2 = vector.load %arg2[%c0_2, %c0_3] : memref<1x32xf32, #tpu.memory_space<vmem>>, vector<1x32xf32>
    %3 = vector.shape_cast %2 : vector<1x32xf32> to vector<32xf32>
    %c0_4 = arith.constant 0 : index
    %c0_5 = arith.constant 0 : index
    %4 = vector.load %arg3[%c0_4, %c0_5] : memref<1x32xf32, #tpu.memory_space<vmem>>, vector<1x32xf32>
    %5 = vector.shape_cast %4 : vector<1x32xf32> to vector<32xf32>
    %cst = arith.constant dense<0.000000e+00> : vector<16xf32>
    %6 = vector.multi_reduction <add>, %1, %cst [1] : vector<16x32xf32> to vector<16xf32>
    %7 = vector.shape_cast %6 : vector<16xf32> to vector<16x1xf32>
    %cst_6 = arith.constant 3.200000e+01 : f32
    %8 = vector.broadcast %cst_6 : f32 to vector<16x1xf32>
    %9 = arith.divf %7, %8 : vector<16x1xf32>
    %10 = vector.broadcast %9 : vector<16x1xf32> to vector<16x32xf32>
    %11 = arith.subf %1, %10 : vector<16x32xf32>
    %12 = arith.mulf %11, %11 : vector<16x32xf32>
    %cst_7 = arith.constant dense<0.000000e+00> : vector<16xf32>
    %13 = vector.multi_reduction <add>, %12, %cst_7 [1] : vector<16x32xf32> to vector<16xf32>
    %14 = vector.shape_cast %13 : vector<16xf32> to vector<16x1xf32>
    %cst_8 = arith.constant 3.200000e+01 : f32
    %15 = vector.broadcast %cst_8 : f32 to vector<16x1xf32>
    %16 = arith.divf %14, %15 : vector<16x1xf32>
    %17 = vector.broadcast %9 : vector<16x1xf32> to vector<16x32xf32>
    %18 = arith.subf %1, %17 : vector<16x32xf32>
    %cst_9 = arith.constant 9.99999974E-6 : f32
    %19 = vector.broadcast %cst_9 : f32 to vector<16x1xf32>
    %20 = arith.addf %16, %19 : vector<16x1xf32>
    %21 = math.rsqrt %20 : vector<16x1xf32>
    %22 = vector.broadcast %21 : vector<16x1xf32> to vector<16x32xf32>
    %23 = arith.mulf %18, %22 : vector<16x32xf32>
    %24 = vector.shape_cast %3 : vector<32xf32> to vector<1x32xf32>
    %25 = vector.broadcast %24 : vector<1x32xf32> to vector<16x32xf32>
    %26 = arith.mulf %23, %25 : vector<16x32xf32>
    %27 = vector.shape_cast %5 : vector<32xf32> to vector<1x32xf32>
    %28 = vector.broadcast %27 : vector<1x32xf32> to vector<16x32xf32>
    %29 = arith.addf %26, %28 : vector<16x32xf32>
    %30 = arith.truncf %29 : vector<16x32xf32> to vector<16x32xbf16>
    %c0_10 = arith.constant 0 : index
    %c0_11 = arith.constant 0 : index
    %31 = vector.load %arg4[%c0_10, %c0_11] : memref<32x96xbf16, #tpu.memory_space<vmem>>, vector<32x96xbf16>
    %cst_12 = arith.constant dense<0.000000e+00> : vector<16x96xf32>
    %32 = tpu.matmul %30, %31, %cst_12 {dimension_numbers = #tpu.dot_dimension_numbers<[1], [0], [0], [1], [0, 0, 1, 1], [], []>} : vector<16x32xbf16>, vector<32x96xbf16>, vector<16x96xf32> -> vector<16x96xf32>
    %33 = vector.extract_strided_slice %32 {offsets = [0, 0], sizes = [16, 16], strides = [1, 1]} : vector<16x96xf32> to vector<16x16xf32>
    %34 = vector.extract_strided_slice %32 {offsets = [0, 16], sizes = [16, 16], strides = [1, 1]} : vector<16x96xf32> to vector<16x16xf32>
    %35 = vector.shape_cast %33 : vector<16x16xf32> to vector<1x16x16xf32>
    %36 = vector.shape_cast %34 : vector<16x16xf32> to vector<1x16x16xf32>
    %37 = tpu.concatenate %35, %36 in 0 : vector<1x16x16xf32>, vector<1x16x16xf32> -> vector<2x16x16xf32>
    %cst_13 = arith.constant 2.500000e-01 : f32
    %38 = vector.broadcast %cst_13 : f32 to vector<2x16x16xf32>
    %39 = arith.mulf %37, %38 : vector<2x16x16xf32>
    %40 = arith.truncf %39 : vector<2x16x16xf32> to vector<2x16x16xbf16>
    %c0_14 = arith.constant 0 : index
    %c0_15 = arith.constant 0 : index
    %c0_16 = arith.constant 0 : index
    %41 = vector.load %arg13[%c0_14, %c0_15, %c0_16] : memref<2x16x16xbf16, #tpu.memory_space<vmem>>, vector<2x16x16xbf16>
    tpu.vector_store %arg13[%c0_14, %c0_15, %c0_16], %40 {strides = array<i32>} : memref<2x16x16xbf16, #tpu.memory_space<vmem>>, vector<2x16x16xbf16>,
    %42 = vector.extract_strided_slice %32 {offsets = [0, 32], sizes = [16, 16], strides = [1, 1]} : vector<16x96xf32> to vector<16x16xf32>
    %43 = vector.extract_strided_slice %32 {offsets = [0, 48], sizes = [16, 16], strides = [1, 1]} : vector<16x96xf32> to vector<16x16xf32>
    %44 = vector.shape_cast %42 : vector<16x16xf32> to vector<1x16x16xf32>
    %45 = vector.shape_cast %43 : vector<16x16xf32> to vector<1x16x16xf32>
    %46 = tpu.concatenate %44, %45 in 0 : vector<1x16x16xf32>, vector<1x16x16xf32> -> vector<2x16x16xf32>
    %47 = arith.truncf %46 : vector<2x16x16xf32> to vector<2x16x16xbf16>
    %48 = vector.extract_strided_slice %32 {offsets = [0, 64], sizes = [16, 16], strides = [1, 1]} : vector<16x96xf32> to vector<16x16xf32>
    %49 = vector.extract_strided_slice %32 {offsets = [0, 80], sizes = [16, 16], strides = [1, 1]} : vector<16x96xf32> to vector<16x16xf32>
    %50 = vector.shape_cast %48 : vector<16x16xf32> to vector<1x16x16xf32>
    %51 = vector.shape_cast %49 : vector<16x16xf32> to vector<1x16x16xf32>
    %52 = tpu.concatenate %50, %51 in 0 : vector<1x16x16xf32>, vector<1x16x16xf32> -> vector<2x16x16xf32>
    %53 = arith.truncf %52 : vector<2x16x16xf32> to vector<2x16x16xbf16>
    %c0_17 = arith.constant 0 : index
    %c0_18 = arith.constant 0 : index
    %c0_19 = arith.constant 0 : index
    %54 = vector.load %arg5[%c0_17, %c0_18, %c0_19] : memref<2x2x16xbf16, #tpu.memory_space<vmem>>, vector<2x2x16xbf16>
    %c0_20 = arith.constant 0 : index
    %c0_21 = arith.constant 0 : index
    %c0_22 = arith.constant 0 : index
    %55 = vector.load %arg6[%c0_20, %c0_21, %c0_22] : memref<2x2x16xbf16, #tpu.memory_space<vmem>>, vector<2x2x16xbf16>
    %c0_23 = arith.constant 0 : index
    %c0_24 = arith.constant 0 : index
    %56 = vector.load %arg7[%c0_23, %c0_24] : memref<32x32xbf16, #tpu.memory_space<vmem>>, vector<32x32xbf16>
    %c0_25 = arith.constant 0 : index
    %c0_26 = arith.constant 0 : index
    %57 = vector.load %arg10[%c0_25, %c0_26] : memref<32x128xbf16, #tpu.memory_space<vmem>>, vector<32x128xbf16>
    %c0_27 = arith.constant 0 : index
    %c0_28 = arith.constant 0 : index
    %58 = vector.load %arg11[%c0_27, %c0_28] : memref<128x32xbf16, #tpu.memory_space<vmem>>, vector<128x32xbf16>
    %c0_29 = arith.constant 0 : index
    %c0_30 = arith.constant 0 : index
    %59 = vector.load %arg8[%c0_29, %c0_30] : memref<1x32xf32, #tpu.memory_space<vmem>>, vector<1x32xf32>
    %60 = vector.shape_cast %59 : vector<1x32xf32> to vector<32xf32>
    %c0_31 = arith.constant 0 : index
    %c0_32 = arith.constant 0 : index
    %61 = vector.load %arg9[%c0_31, %c0_32] : memref<1x32xf32, #tpu.memory_space<vmem>>, vector<1x32xf32>
    %62 = vector.shape_cast %61 : vector<1x32xf32> to vector<32xf32>
    %c0_i32 = arith.constant 0 : i32
    %c16_i32 = arith.constant 16 : i32
    %63 = arith.muli %c0_i32, %c16_i32 : i32
    %c0_33 = arith.constant 0 : index
    %64 = arith.index_cast %63 : i32 to index
    %c0_34 = arith.constant 0 : index
    %65 = vector.load %arg13[%c0_33, %64, %c0_34] : memref<2x16x16xbf16, #tpu.memory_space<vmem>>, vector<2x16x16xbf16>
    "tpu.trace_start"() <{level = 10 : i32, message = "hik,hjk->hij"}> : () -> ()
    %cst_35 = arith.constant dense<0.000000e+00> : vector<2x16x16xf32>
    %66 = tpu.matmul %65, %47, %cst_35 {dimension_numbers = #tpu.dot_dimension_numbers<[2], [2], [1], [1], [0, 0, 0, 1, 1, 1], [0], [0]>} : vector<2x16x16xbf16>, vector<2x16x16xbf16>, vector<2x16x16xf32> -> vector<2x16x16xf32>
    %cst_36 = arith.constant dense<0.000000e+00> : vector<2x16x2xf32>
    %67 = tpu.matmul %65, %54, %cst_36 {dimension_numbers = #tpu.dot_dimension_numbers<[2], [2], [1], [1], [0, 0, 0, 1, 1, 1], [0], [0]>} : vector<2x16x16xbf16>, vector<2x2x16xbf16>, vector<2x16x2xf32> -> vector<2x16x2xf32>
    "tpu.trace_stop"() : () -> ()
    %cst_37 = arith.constant dense<0xFF800000> : vector<2x16xf32>
    %68 = vector.multi_reduction <maximumf>, %66, %cst_37 [2] : vector<2x16x16xf32> to vector<2x16xf32>
    %69 = vector.shape_cast %68 : vector<2x16xf32> to vector<2x16x1xf32>
    %cst_38 = arith.constant dense<0xFF800000> : vector<2x16xf32>
    %70 = vector.multi_reduction <maximumf>, %67, %cst_38 [2] : vector<2x16x2xf32> to vector<2x16xf32>
    %71 = vector.shape_cast %70 : vector<2x16xf32> to vector<2x16x1xf32>
    %72 = arith.maximumf %69, %71 : vector<2x16x1xf32>
    %73 = vector.broadcast %72 : vector<2x16x1xf32> to vector<2x16x16xf32>
    %74 = arith.subf %66, %73 : vector<2x16x16xf32>
    %75 = math.exp %74 : vector<2x16x16xf32>
    %76 = vector.broadcast %72 : vector<2x16x1xf32> to vector<2x16x2xf32>
    %77 = arith.subf %67, %76 : vector<2x16x2xf32>
    %78 = math.exp %77 : vector<2x16x2xf32>
    %cst_39 = arith.constant dense<0.000000e+00> : vector<2x16xf32>
    %79 = vector.multi_reduction <add>, %75, %cst_39 [2] : vector<2x16x16xf32> to vector<2x16xf32>
    %80 = vector.shape_cast %79 : vector<2x16xf32> to vector<2x16x1xf32>
    %cst_40 = arith.constant dense<0.000000e+00> : vector<2x16xf32>
    %81 = vector.multi_reduction <add>, %78, %cst_40 [2] : vector<2x16x2xf32> to vector<2x16xf32>
    %82 = vector.shape_cast %81 : vector<2x16xf32> to vector<2x16x1xf32>
    %83 = arith.addf %80, %82 : vector<2x16x1xf32>
    %84 = arith.truncf %75 : vector<2x16x16xf32> to vector<2x16x16xbf16>
    "tpu.trace_start"() <{level = 10 : i32, message = "hij,hjk->hik"}> : () -> ()
    %cst_41 = arith.constant dense<0.000000e+00> : vector<2x16x16xf32>
    %85 = tpu.matmul %84, %53, %cst_41 {dimension_numbers = #tpu.dot_dimension_numbers<[2], [1], [1], [2], [0, 0, 0, 1, 1, 2], [0], [0]>} : vector<2x16x16xbf16>, vector<2x16x16xbf16>, vector<2x16x16xf32> -> vector<2x16x16xf32>
    "tpu.trace_stop"() : () -> ()
    %86 = arith.truncf %78 : vector<2x16x2xf32> to vector<2x16x2xbf16>
    "tpu.trace_start"() <{level = 10 : i32, message = "hij,hjk->hik"}> : () -> ()
    %cst_42 = arith.constant dense<0.000000e+00> : vector<2x16x16xf32>
    %87 = tpu.matmul %86, %55, %cst_42 {dimension_numbers = #tpu.dot_dimension_numbers<[2], [1], [1], [2], [0, 0, 0, 1, 1, 2], [0], [0]>} : vector<2x16x2xbf16>, vector<2x2x16xbf16>, vector<2x16x16xf32> -> vector<2x16x16xf32>
    "tpu.trace_stop"() : () -> ()
    %88 = arith.addf %85, %87 : vector<2x16x16xf32>
    %89 = tpu.reciprocal %83 {approx = true} : vector<2x16x1xf32> -> vector<2x16x1xf32>
    %90 = vector.broadcast %89 : vector<2x16x1xf32> to vector<2x16x16xf32>
    %91 = arith.mulf %88, %90 : vector<2x16x16xf32>
    %92 = vector.extract_strided_slice %91 {offsets = [0, 0, 0], sizes = [1, 16, 16], strides = [1, 1, 1]} : vector<2x16x16xf32> to vector<1x16x16xf32>
    %93 = vector.shape_cast %92 : vector<1x16x16xf32> to vector<16x16xf32>
    %94 = vector.extract_strided_slice %91 {offsets = [1, 0, 0], sizes = [1, 16, 16], strides = [1, 1, 1]} : vector<2x16x16xf32> to vector<1x16x16xf32>
    %95 = vector.shape_cast %94 : vector<1x16x16xf32> to vector<16x16xf32>
    %96 = tpu.concatenate %93, %95 in 1 : vector<16x16xf32>, vector<16x16xf32> -> vector<16x32xf32>
    %97 = arith.truncf %96 : vector<16x32xf32> to vector<16x32xbf16>
    %cst_43 = arith.constant dense<0.000000e+00> : vector<16x32xf32>
    %98 = tpu.matmul %97, %56, %cst_43 {dimension_numbers = #tpu.dot_dimension_numbers<[1], [0], [0], [1], [0, 0, 1, 1], [], []>} : vector<16x32xbf16>, vector<32x32xbf16>, vector<16x32xf32> -> vector<16x32xf32>
    %c0_44 = arith.constant 0 : index
    %99 = arith.index_cast %63 : i32 to index
    %c0_45 = arith.constant 0 : index
    %100 = vector.load %arg1[%c0_44, %99, %c0_45] : memref<1x16x32xf32, #tpu.memory_space<vmem>>, vector<1x16x32xf32>
    %101 = vector.shape_cast %100 : vector<1x16x32xf32> to vector<16x32xf32>
    %102 = arith.addf %98, %101 : vector<16x32xf32>
    %cst_46 = arith.constant dense<0.000000e+00> : vector<16xf32>
    %103 = vector.multi_reduction <add>, %102, %cst_46 [1] : vector<16x32xf32> to vector<16xf32>
    %104 = vector.shape_cast %103 : vector<16xf32> to vector<16x1xf32>
    %cst_47 = arith.constant 3.200000e+01 : f32
    %105 = vector.broadcast %cst_47 : f32 to vector<16x1xf32>
    %106 = arith.divf %104, %105 : vector<16x1xf32>
    %107 = vector.broadcast %106 : vector<16x1xf32> to vector<16x32xf32>
    %108 = arith.subf %102, %107 : vector<16x32xf32>
    %109 = arith.mulf %108, %108 : vector<16x32xf32>
    %cst_48 = arith.constant dense<0.000000e+00> : vector<16xf32>
    %110 = vector.multi_reduction <add>, %109, %cst_48 [1] : vector<16x32xf32> to vector<16xf32>
    %111 = vector.shape_cast %110 : vector<16xf32> to vector<16x1xf32>
    %cst_49 = arith.constant 3.200000e+01 : f32
    %112 = vector.broadcast %cst_49 : f32 to vector<16x1xf32>
    %113 = arith.divf %111, %112 : vector<16x1xf32>
    %114 = vector.broadcast %106 : vector<16x1xf32> to vector<16x32xf32>
    %115 = arith.subf %102, %114 : vector<16x32xf32>
    %cst_50 = arith.constant 9.99999974E-6 : f32
    %116 = vector.broadcast %cst_50 : f32 to vector<16x1xf32>
    %117 = arith.addf %113, %116 : vector<16x1xf32>
    %118 = math.rsqrt %117 : vector<16x1xf32>
    %119 = vector.broadcast %118 : vector<16x1xf32> to vector<16x32xf32>
    %120 = arith.mulf %115, %119 : vector<16x32xf32>
    %121 = vector.shape_cast %60 : vector<32xf32> to vector<1x32xf32>
    %122 = vector.broadcast %121 : vector<1x32xf32> to vector<16x32xf32>
    %123 = arith.mulf %120, %122 : vector<16x32xf32>
    %124 = vector.shape_cast %62 : vector<32xf32> to vector<1x32xf32>
    %125 = vector.broadcast %124 : vector<1x32xf32> to vector<16x32xf32>
    %126 = arith.addf %123, %125 : vector<16x32xf32>
    %127 = arith.truncf %126 : vector<16x32xf32> to vector<16x32xbf16>
    %cst_51 = arith.constant dense<0.000000e+00> : vector<16x128xf32>
    %128 = tpu.matmul %127, %57, %cst_51 {dimension_numbers = #tpu.dot_dimension_numbers<[1], [0], [0], [1], [0, 0, 1, 1], [], []>} : vector<16x32xbf16>, vector<32x128xbf16>, vector<16x128xf32> -> vector<16x128xf32>
    %cst_52 = arith.constant 5.000000e-01 : f32
    %129 = vector.broadcast %cst_52 : f32 to vector<16x128xf32>
    %130 = arith.mulf %129, %128 : vector<16x128xf32>
    %cst_53 = arith.constant 0.707106769 : f32
    %131 = vector.broadcast %cst_53 : f32 to vector<16x128xf32>
    %132 = arith.mulf %128, %131 : vector<16x128xf32>
    %133 = math.erf %132 : vector<16x128xf32>
    %cst_54 = arith.constant 1.000000e+00 : f32
    %134 = vector.broadcast %cst_54 : f32 to vector<16x128xf32>
    %135 = arith.addf %134, %133 : vector<16x128xf32>
    %136 = arith.mulf %130, %135 : vector<16x128xf32>
    %137 = arith.truncf %136 : vector<16x128xf32> to vector<16x128xbf16>
    %cst_55 = arith.constant dense<0.000000e+00> : vector<16x32xf32>
    %138 = tpu.matmul %137, %58, %cst_55 {dimension_numbers = #tpu.dot_dimension_numbers<[1], [0], [0], [1], [0, 0, 1, 1], [], []>} : vector<16x128xbf16>, vector<128x32xbf16>, vector<16x32xf32> -> vector<16x32xf32>
    %139 = arith.addf %138, %102 : vector<16x32xf32>
    %c0_56 = arith.constant 0 : index
    %140 = arith.index_cast %63 : i32 to index
    %c0_57 = arith.constant 0 : index
    %141 = vector.load %arg12[%c0_56, %140, %c0_57] : memref<1x16x32xf32, #tpu.memory_space<vmem>>, vector<1x16x32xf32>
    %142 = vector.shape_cast %141 : vector<1x16x32xf32> to vector<16x32xf32>
    %143 = vector.shape_cast %139 : vector<16x32xf32> to vector<1x16x32xf32>
    tpu.vector_store %arg12[%c0_56, %140, %c0_57], %143 {strides = array<i32>} : memref<1x16x32xf32, #tpu.memory_space<vmem>>, vector<1x16x32xf32>,
    %c1_i32 = arith.constant 1 : i32
    return
  }
  func.func @transform_0(%arg0: i32) -> (i32, i32, i32) {
    %c0_i32 = arith.constant 0 : i32
    %c0_i32_0 = arith.constant 0 : i32
    %c0_i32_1 = arith.constant 0 : i32
    return %arg0, %c0_i32, %c0_i32_0 : i32, i32, i32
  }
  func.func @transform_1(%arg0: i32) -> (i32, i32) {
    %c0_i32 = arith.constant 0 : i32
    %c0_i32_0 = arith.constant 0 : i32
    %c0_i32_1 = arith.constant 0 : i32
    return %c0_i32, %c0_i32_0 : i32, i32
  }
  func.func @transform_2(%arg0: i32) -> (i32, i32) {
    %c0_i32 = arith.constant 0 : i32
    %c0_i32_0 = arith.constant 0 : i32
    %c0_i32_1 = arith.constant 0 : i32
    return %c0_i32, %c0_i32_0 : i32, i32
  }
  func.func @transform_3(%arg0: i32) -> (i32, i32) {
    %c0_i32 = arith.constant 0 : i32
    %c0_i32_0 = arith.constant 0 : i32
    %c0_i32_1 = arith.constant 0 : i32
    return %c0_i32, %c0_i32_0 : i32, i32
  }
  func.func @transform_4(%arg0: i32) -> (i32, i32, i32) {
    %c0_i32 = arith.constant 0 : i32
    %c0_i32_0 = arith.constant 0 : i32
    %c0_i32_1 = arith.constant 0 : i32
    %c0_i32_2 = arith.constant 0 : i32
    return %c0_i32, %c0_i32_0, %c0_i32_1 : i32, i32, i32
  }
  func.func @transform_5(%arg0: i32) -> (i32, i32, i32) {
    %c0_i32 = arith.constant 0 : i32
    %c0_i32_0 = arith.constant 0 : i32
    %c0_i32_1 = arith.constant 0 : i32
    %c0_i32_2 = arith.constant 0 : i32
    return %c0_i32, %c0_i32_0, %c0_i32_1 : i32, i32, i32
  }
  func.func @transform_6(%arg0: i32) -> (i32, i32) {
    %c0_i32 = arith.constant 0 : i32
    %c0_i32_0 = arith.constant 0 : i32
    %c0_i32_1 = arith.constant 0 : i32
    return %c0_i32, %c0_i32_0 : i32, i32
  }
  func.func @transform_7(%arg0: i32) -> (i32, i32) {
    %c0_i32 = arith.constant 0 : i32
    %c0_i32_0 = arith.constant 0 : i32
    %c0_i32_1 = arith.constant 0 : i32
    return %c0_i32, %c0_i32_0 : i32, i32
  }
  func.func @transform_8(%arg0: i32) -> (i32, i32) {
    %c0_i32 = arith.constant 0 : i32
    %c0_i32_0 = arith.constant 0 : i32
    %c0_i32_1 = arith.constant 0 : i32
    return %c0_i32, %c0_i32_0 : i32, i32
  }
  func.func @transform_9(%arg0: i32) -> (i32, i32) {
    %c0_i32 = arith.constant 0 : i32
    %c0_i32_0 = arith.constant 0 : i32
    %c0_i32_1 = arith.constant 0 : i32
    return %c0_i32, %c0_i32_0 : i32, i32
  }
  func.func @transform_10(%arg0: i32) -> (i32, i32) {
    %c0_i32 = arith.constant 0 : i32
    %c0_i32_0 = arith.constant 0 : i32
    %c0_i32_1 = arith.constant 0 : i32
    return %c0_i32, %c0_i32_0 : i32, i32
  }
  func.func @transform_11(%arg0: i32) -> (i32, i32, i32) {
    %c0_i32 = arith.constant 0 : i32
    %c0_i32_0 = arith.constant 0 : i32
    %c0_i32_1 = arith.constant 0 : i32
    return %arg0, %c0_i32, %c0_i32_0 : i32, i32, i32
  }
}

</mosaic_0001>

<llo_original>
// kernel: tpu_custom_call.1
$region0: #{tpu_custom_call.1}
  #allocation0 [shape = 'u32[]', space=smem, size = 0x4, offset = 0x4, fixed_abs, tag = 'smem constant byte address 0x4 - core index']
  #allocation1 [shape = 'u32[144,128]{1,0:T(1,128)}', space=vmem, size = 0x12000, scoped, tag = 'internal scratch']
  #allocation2 [shape = 'bf16[2,16,16]{2,1,0:T(16,128)(2,1)}', space=vmem, size = 0x2000, scoped, tag = 'scratch operand']
  %s0 = inlined_call_operand.vmem [shape: f32[2,16,32], index: 0, kind: input, shape index: {}]
  %s1 = inlined_call_operand.vmem [shape: f32[1,32], index: 1, kind: input, shape index: {}]
  %s2 = inlined_call_operand.vmem [shape: f32[1,32], index: 2, kind: input, shape index: {}]
  %s3 = inlined_call_operand.vmem [shape: bf16[32,96], index: 3, kind: input, shape index: {}]
  %s4 = inlined_call_operand.vmem [shape: bf16[2,2,16], index: 4, kind: input, shape index: {}]
  %s5 = inlined_call_operand.vmem [shape: bf16[2,2,16], index: 5, kind: input, shape index: {}]
  %s6 = inlined_call_operand.vmem [shape: bf16[32,32], index: 6, kind: input, shape index: {}]
  %s7 = inlined_call_operand.vmem [shape: f32[1,32], index: 7, kind: input, shape index: {}]
  %s8 = inlined_call_operand.vmem [shape: f32[1,32], index: 8, kind: input, shape index: {}]
  %s9 = inlined_call_operand.vmem [shape: bf16[32,128], index: 9, kind: input, shape index: {}]
  %s10 = inlined_call_operand.vmem [shape: bf16[128,32], index: 10, kind: input, shape index: {}]
  %s11 = inlined_call_operand.hbm [shape: f32[2,16,32], index: 11, kind: output, shape index: {}]
  %s12 = sld [smem:[#allocation0]]
  $region77: #{tpu_custom_call.1} parent=0
    _
  %s14 = ssub.s32 1, %s12
  %s15 = scalar_select 0, %s14, %s12
  $region1: #{tpu_custom_call.1} parent=0
    #allocation3 [shape = 'u8[16384]{0}', space=vmem, size = 0x4000, scoped, tag = 'output window, operand 0']
    #allocation4 [shape = 's32[2]{0}', space=sflag, size = 0x8, scoped, tag = 'scoped memory for tpu_custom_call.1']
    %16 = vsyncpa [#allocation4], 0
    %s17 = scalar_lea.sflag [#allocation4], 1
    %18 = vsyncpa %s17, 0
    loop: start=0, step=1, limit=4
    $region2: #{tpu_custom_call.1} parent=1 // loop_pre_header
      _
    $region3: #{tpu_custom_call.1} parent=1 // loop_header
      %s20 = sphi 0, %s24
      %p21 = scmp.ge.s32.totalorder %s20, 4
      %s30 = sphi 0, %s32
      %s33 = sphi 0, %s30
      %s34 = sphi 0, %s33
      %s50 = sphi 0, %s34
      %s54 = sphi 0, %s54
      %s56 = sphi 0, %s54
      %s57 = sphi 0, %s56
      %s71 = sphi 0, %s57
      %s75 = sphi 0, %s75
      %s77 = sphi 0, %s75
      %s78 = sphi 0, %s77
      %s92 = sphi 0, %s78
      %s96 = sphi 0, %s96
      %s98 = sphi 0, %s96
      %s99 = sphi 0, %s98
      %s113 = sphi 0, %s99
      %s117 = sphi 0, %s117
      %s119 = sphi 0, %s117
      %s120 = sphi 0, %s119
      %s134 = sphi 0, %s120
      %s138 = sphi 0, %s138
      %s140 = sphi 0, %s138
      %s141 = sphi 0, %s140
      %s155 = sphi 0, %s141
      %s159 = sphi 0, %s159
      %s161 = sphi 0, %s159
      %s162 = sphi 0, %s161
      %s176 = sphi 0, %s162
      %s180 = sphi 0, %s180
      %s182 = sphi 0, %s180
      %s183 = sphi 0, %s182
      %s197 = sphi 0, %s183
      %s201 = sphi 0, %s201
      %s203 = sphi 0, %s201
      %s204 = sphi 0, %s203
      %s218 = sphi 0, %s204
      %s222 = sphi 0, %s222
      %s224 = sphi 0, %s222
      %s225 = sphi 0, %s224
      %s239 = sphi 0, %s225
      %s243 = sphi 0, %s243
      %s245 = sphi 0, %s243
      %s246 = sphi 0, %s245
      %s260 = sphi 0, %s246
      %s266 = sphi 0, %s268
      %s269 = sphi 0, %s266
      %s270 = sphi 0, %s269
      %s286 = sphi 0, %s270
    $region4: #{tpu_custom_call.1} parent=1 // loop_header_branch
      %23 = sbr.rel (%p21) target = $region8
    $region5: #{tpu_custom_call.1} parent=1 // loop_body
      %s25 = ssub.s32 %s20, 1
      %s26 = ssub.s32 %s20, 2
      %s27 = sadd.s32 %s20, 1
      %s28 = ssub.s32 %s20, %s27
      %p29 = scmp.eq.s32.totalorder %s28, 0
      %s31 = sadd.s32 %s30, 1
      %s32 = scalar_select %p29, %s30, %s31
      %p35 = pneg %p29
      %p36 = scmp.eq.s32.totalorder %s20, 1
      %p37 = por %p35, %p36
      %p38 = scmp.ne.s32.totalorder %s30, %s33
      %p39 = scmp.eq.s32.totalorder %s20, 0
      %p40 = por %p38, %p39
      %p41 = scmp.ne.s32.totalorder %s30, %s33
      %p42 = scmp.eq.s32.totalorder %s25, 1
      %p43 = por %p41, %p42
      %p44 = scmp.ne.s32.totalorder %s33, %s34
      %p45 = scmp.eq.s32.totalorder %s25, 0
      %p46 = por %p44, %p45
      %p47 = scmp.ne.s32.totalorder %s33, %s34
      %p48 = scmp.eq.s32.totalorder %s26, 1
      %p49 = por %p47, %p48
      %p51 = scmp.ne.s32.totalorder %s34, %s50
      %p52 = scmp.eq.s32.totalorder %s26, 0
      %p53 = por %p51, %p52
      %s55 = sadd.s32 %s54, 1
      %p58 = scmp.eq.s32.totalorder %s20, 1
      %p59 = scmp.ne.s32.totalorder %s54, %s56
      %p60 = scmp.eq.s32.totalorder %s20, 0
      %p61 = por %p59, %p60
      %p62 = scmp.ne.s32.totalorder %s54, %s56
      %p63 = scmp.eq.s32.totalorder %s25, 1
      %p64 = por %p62, %p63
      %p65 = scmp.ne.s32.totalorder %s56, %s57
      %p66 = scmp.eq.s32.totalorder %s25, 0
      %p67 = por %p65, %p66
      %p68 = scmp.ne.s32.totalorder %s56, %s57
      %p69 = scmp.eq.s32.totalorder %s26, 1
      %p70 = por %p68, %p69
      %p72 = scmp.ne.s32.totalorder %s57, %s71
      %p73 = scmp.eq.s32.totalorder %s26, 0
      %p74 = por %p72, %p73
      %s76 = sadd.s32 %s75, 1
      %p79 = scmp.eq.s32.totalorder %s20, 1
      %p80 = scmp.ne.s32.totalorder %s75, %s77
      %p81 = scmp.eq.s32.totalorder %s20, 0
      %p82 = por %p80, %p81
      %p83 = scmp.ne.s32.totalorder %s75, %s77
      %p84 = scmp.eq.s32.totalorder %s25, 1
      %p85 = por %p83, %p84
      %p86 = scmp.ne.s32.totalorder %s77, %s78
      %p87 = scmp.eq.s32.totalorder %s25, 0
      %p88 = por %p86, %p87
      %p89 = scmp.ne.s32.totalorder %s77, %s78
      %p90 = scmp.eq.s32.totalorder %s26, 1
      %p91 = por %p89, %p90
      %p93 = scmp.ne.s32.totalorder %s78, %s92
      %p94 = scmp.eq.s32.totalorder %s26, 0
      %p95 = por %p93, %p94
      %s97 = sadd.s32 %s96, 1
      %p100 = scmp.eq.s32.totalorder %s20, 1
      %p101 = scmp.ne.s32.totalorder %s96, %s98
      %p102 = scmp.eq.s32.totalorder %s20, 0
      %p103 = por %p101, %p102
      %p104 = scmp.ne.s32.totalorder %s96, %s98
      %p105 = scmp.eq.s32.totalorder %s25, 1
      %p106 = por %p104, %p105
      %p107 = scmp.ne.s32.totalorder %s98, %s99
      %p108 = scmp.eq.s32.totalorder %s25, 0
      %p109 = por %p107, %p108
      %p110 = scmp.ne.s32.totalorder %s98, %s99
      %p111 = scmp.eq.s32.totalorder %s26, 1
      %p112 = por %p110, %p111
      %p114 = scmp.ne.s32.totalorder %s99, %s113
      %p115 = scmp.eq.s32.totalorder %s26, 0
      %p116 = por %p114, %p115
      %s118 = sadd.s32 %s117, 1
      %p121 = scmp.eq.s32.totalorder %s20, 1
      %p122 = scmp.ne.s32.totalorder %s117, %s119
      %p123 = scmp.eq.s32.totalorder %s20, 0
      %p124 = por %p122, %p123
      %p125 = scmp.ne.s32.totalorder %s117, %s119
      %p126 = scmp.eq.s32.totalorder %s25, 1
      %p127 = por %p125, %p126
      %p128 = scmp.ne.s32.totalorder %s119, %s120
      %p129 = scmp.eq.s32.totalorder %s25, 0
      %p130 = por %p128, %p129
      %p131 = scmp.ne.s32.totalorder %s119, %s120
      %p132 = scmp.eq.s32.totalorder %s26, 1
      %p133 = por %p131, %p132
      %p135 = scmp.ne.s32.totalorder %s120, %s134
      %p136 = scmp.eq.s32.totalorder %s26, 0
      %p137 = por %p135, %p136
      %s139 = sadd.s32 %s138, 1
      %p142 = scmp.eq.s32.totalorder %s20, 1
      %p143 = scmp.ne.s32.totalorder %s138, %s140
      %p144 = scmp.eq.s32.totalorder %s20, 0
      %p145 = por %p143, %p144
      %p146 = scmp.ne.s32.totalorder %s138, %s140
      %p147 = scmp.eq.s32.totalorder %s25, 1
      %p148 = por %p146, %p147
      %p149 = scmp.ne.s32.totalorder %s140, %s141
      %p150 = scmp.eq.s32.totalorder %s25, 0
      %p151 = por %p149, %p150
      %p152 = scmp.ne.s32.totalorder %s140, %s141
      %p153 = scmp.eq.s32.totalorder %s26, 1
      %p154 = por %p152, %p153
      %p156 = scmp.ne.s32.totalorder %s141, %s155
      %p157 = scmp.eq.s32.totalorder %s26, 0
      %p158 = por %p156, %p157
      %s160 = sadd.s32 %s159, 1
      %p163 = scmp.eq.s32.totalorder %s20, 1
      %p164 = scmp.ne.s32.totalorder %s159, %s161
      %p165 = scmp.eq.s32.totalorder %s20, 0
      %p166 = por %p164, %p165
      %p167 = scmp.ne.s32.totalorder %s159, %s161
      %p168 = scmp.eq.s32.totalorder %s25, 1
      %p169 = por %p167, %p168
      %p170 = scmp.ne.s32.totalorder %s161, %s162
      %p171 = scmp.eq.s32.totalorder %s25, 0
      %p172 = por %p170, %p171
      %p173 = scmp.ne.s32.totalorder %s161, %s162
      %p174 = scmp.eq.s32.totalorder %s26, 1
      %p175 = por %p173, %p174
      %p177 = scmp.ne.s32.totalorder %s162, %s176
      %p178 = scmp.eq.s32.totalorder %s26, 0
      %p179 = por %p177, %p178
      %s181 = sadd.s32 %s180, 1
      %p184 = scmp.eq.s32.totalorder %s20, 1
      %p185 = scmp.ne.s32.totalorder %s180, %s182
      %p186 = scmp.eq.s32.totalorder %s20, 0
      %p187 = por %p185, %p186
      %p188 = scmp.ne.s32.totalorder %s180, %s182
      %p189 = scmp.eq.s32.totalorder %s25, 1
      %p190 = por %p188, %p189
      %p191 = scmp.ne.s32.totalorder %s182, %s183
      %p192 = scmp.eq.s32.totalorder %s25, 0
      %p193 = por %p191, %p192
      %p194 = scmp.ne.s32.totalorder %s182, %s183
      %p195 = scmp.eq.s32.totalorder %s26, 1
      %p196 = por %p194, %p195
      %p198 = scmp.ne.s32.totalorder %s183, %s197
      %p199 = scmp.eq.s32.totalorder %s26, 0
      %p200 = por %p198, %p199
      %s202 = sadd.s32 %s201, 1
      %p205 = scmp.eq.s32.totalorder %s20, 1
      %p206 = scmp.ne.s32.totalorder %s201, %s203
      %p207 = scmp.eq.s32.totalorder %s20, 0
      %p208 = por %p206, %p207
      %p209 = scmp.ne.s32.totalorder %s201, %s203
      %p210 = scmp.eq.s32.totalorder %s25, 1
      %p211 = por %p209, %p210
      %p212 = scmp.ne.s32.totalorder %s203, %s204
      %p213 = scmp.eq.s32.totalorder %s25, 0
      %p214 = por %p212, %p213
      %p215 = scmp.ne.s32.totalorder %s203, %s204
      %p216 = scmp.eq.s32.totalorder %s26, 1
      %p217 = por %p215, %p216
      %p219 = scmp.ne.s32.totalorder %s204, %s218
      %p220 = scmp.eq.s32.totalorder %s26, 0
      %p221 = por %p219, %p220
      %s223 = sadd.s32 %s222, 1
      %p226 = scmp.eq.s32.totalorder %s20, 1
      %p227 = scmp.ne.s32.totalorder %s222, %s224
      %p228 = scmp.eq.s32.totalorder %s20, 0
      %p229 = por %p227, %p228
      %p230 = scmp.ne.s32.totalorder %s222, %s224
      %p231 = scmp.eq.s32.totalorder %s25, 1
      %p232 = por %p230, %p231
      %p233 = scmp.ne.s32.totalorder %s224, %s225
      %p234 = scmp.eq.s32.totalorder %s25, 0
      %p235 = por %p233, %p234
      %p236 = scmp.ne.s32.totalorder %s224, %s225
      %p237 = scmp.eq.s32.totalorder %s26, 1
      %p238 = por %p236, %p237
      %p240 = scmp.ne.s32.totalorder %s225, %s239
      %p241 = scmp.eq.s32.totalorder %s26, 0
      %p242 = por %p240, %p241
      %s244 = sadd.s32 %s243, 1
      %p247 = scmp.eq.s32.totalorder %s20, 1
      %p248 = scmp.ne.s32.totalorder %s243, %s245
      %p249 = scmp.eq.s32.totalorder %s20, 0
      %p250 = por %p248, %p249
      %p251 = scmp.ne.s32.totalorder %s243, %s245
      %p252 = scmp.eq.s32.totalorder %s25, 1
      %p253 = por %p251, %p252
      %p254 = scmp.ne.s32.totalorder %s245, %s246
      %p255 = scmp.eq.s32.totalorder %s25, 0
      %p256 = por %p254, %p255
      %p257 = scmp.ne.s32.totalorder %s245, %s246
      %p258 = scmp.eq.s32.totalorder %s26, 1
      %p259 = por %p257, %p258
      %p261 = scmp.ne.s32.totalorder %s246, %s260
      %p262 = scmp.eq.s32.totalorder %s26, 0
      %p263 = por %p261, %p262
      %s264 = ssub.s32 %s20, %s27
      %p265 = scmp.eq.s32.totalorder %s264, 0
      %s267 = sadd.s32 %s266, 1
      %s268 = scalar_select %p265, %s266, %s267
      %p271 = pneg %p265
      %p272 = scmp.eq.s32.totalorder %s20, 1
      %p273 = por %p271, %p272
      %p274 = scmp.ne.s32.totalorder %s266, %s269
      %p275 = scmp.eq.s32.totalorder %s20, 0
      %p276 = por %p274, %p275
      %p277 = scmp.ne.s32.totalorder %s266, %s269
      %p278 = scmp.eq.s32.totalorder %s25, 1
      %p279 = por %p277, %p278
      %p280 = scmp.ne.s32.totalorder %s269, %s270
      %p281 = scmp.eq.s32.totalorder %s25, 0
      %p282 = por %p280, %p281
      %p283 = scmp.ne.s32.totalorder %s269, %s270
      %p284 = scmp.eq.s32.totalorder %s26, 1
      %p285 = por %p283, %p284
      %p287 = scmp.ne.s32.totalorder %s270, %s286
      %p288 = scmp.eq.s32.totalorder %s26, 0
      %p289 = por %p287, %p288
      %p290 = scmp.le.s32.totalorder 1, %s20
      %p291 = scmp.lt.s32.totalorder %s20, 3
      %p292 = pnand %p290, %p291
      %p293 = pneg %p292
      // Predicated region
      $region9: #{tpu_custom_call.1} parent=5 // pred_check
        _
      $region10: #{tpu_custom_call.1} parent=5 // pred_check_branch
        %295 = sbr.rel (%p292) target = $region12
      $region11: #{tpu_custom_call.1} parent=5 // pred_region
        %s296 = ssub.s32 %s20, 1
        // Predicated region
        $region13: #{tpu_custom_call.1} parent=11 // pred_check
          %p297 = pneg %p67
        $region14: #{tpu_custom_call.1} parent=11 // pred_check_branch
          %299 = sbr.rel (%p297) target = $region16
        $region15: #{tpu_custom_call.1} parent=11 // pred_region
          _
        $region16: #{tpu_custom_call.1} parent=11 // pred_fallthru
          _
        // Predicated region
        $region17: #{tpu_custom_call.1} parent=11 // pred_check
          %p300 = pneg %p88
        $region18: #{tpu_custom_call.1} parent=11 // pred_check_branch
          %302 = sbr.rel (%p300) target = $region20
        $region19: #{tpu_custom_call.1} parent=11 // pred_region
          _
        $region20: #{tpu_custom_call.1} parent=11 // pred_fallthru
          _
        // Predicated region
        $region21: #{tpu_custom_call.1} parent=11 // pred_check
          %p303 = pneg %p109
        $region22: #{tpu_custom_call.1} parent=11 // pred_check_branch
          %305 = sbr.rel (%p303) target = $region24
        $region23: #{tpu_custom_call.1} parent=11 // pred_region
          _
        $region24: #{tpu_custom_call.1} parent=11 // pred_fallthru
          _
        // Predicated region
        $region25: #{tpu_custom_call.1} parent=11 // pred_check
          %p306 = pneg %p130
        $region26: #{tpu_custom_call.1} parent=11 // pred_check_branch
          %308 = sbr.rel (%p306) target = $region28
        $region27: #{tpu_custom_call.1} parent=11 // pred_region
          _
        $region28: #{tpu_custom_call.1} parent=11 // pred_fallthru
          _
        // Predicated region
        $region29: #{tpu_custom_call.1} parent=11 // pred_check
          %p309 = pneg %p151
        $region30: #{tpu_custom_call.1} parent=11 // pred_check_branch
          %311 = sbr.rel (%p309) target = $region32
        $region31: #{tpu_custom_call.1} parent=11 // pred_region
          _
        $region32: #{tpu_custom_call.1} parent=11 // pred_fallthru
          _
        // Predicated region
        $region33: #{tpu_custom_call.1} parent=11 // pred_check
          %p312 = pneg %p172
        $region34: #{tpu_custom_call.1} parent=11 // pred_check_branch
          %314 = sbr.rel (%p312) target = $region36
        $region35: #{tpu_custom_call.1} parent=11 // pred_region
          _
        $region36: #{tpu_custom_call.1} parent=11 // pred_fallthru
          _
        // Predicated region
        $region37: #{tpu_custom_call.1} parent=11 // pred_check
          %p315 = pneg %p193
        $region38: #{tpu_custom_call.1} parent=11 // pred_check_branch
          %317 = sbr.rel (%p315) target = $region40
        $region39: #{tpu_custom_call.1} parent=11 // pred_region
          _
        $region40: #{tpu_custom_call.1} parent=11 // pred_fallthru
          _
        // Predicated region
        $region41: #{tpu_custom_call.1} parent=11 // pred_check
          %p318 = pneg %p214
        $region42: #{tpu_custom_call.1} parent=11 // pred_check_branch
          %320 = sbr.rel (%p318) target = $region44
        $region43: #{tpu_custom_call.1} parent=11 // pred_region
          _
        $region44: #{tpu_custom_call.1} parent=11 // pred_fallthru
          _
        // Predicated region
        $region45: #{tpu_custom_call.1} parent=11 // pred_check
          %p321 = pneg %p235
        $region46: #{tpu_custom_call.1} parent=11 // pred_check_branch
          %323 = sbr.rel (%p321) target = $region48
        $region47: #{tpu_custom_call.1} parent=11 // pred_region
          _
        $region48: #{tpu_custom_call.1} parent=11 // pred_fallthru
          _
        // Predicated region
        $region49: #{tpu_custom_call.1} parent=11 // pred_check
          %p324 = pneg %p256
        $region50: #{tpu_custom_call.1} parent=11 // pred_check_branch
          %326 = sbr.rel (%p324) target = $region52
        $region51: #{tpu_custom_call.1} parent=11 // pred_region
          _
        $region52: #{tpu_custom_call.1} parent=11 // pred_fallthru
          _
      $region12: #{tpu_custom_call.1} parent=5 // pred_fallthru
        _
      %p327 = scmp.lt.s32.totalorder %s20, 2
      // Predicated region
      $region53: #{tpu_custom_call.1} parent=5 // pred_check
        %p328 = pneg %p327
      $region54: #{tpu_custom_call.1} parent=5 // pred_check_branch
        %330 = sbr.rel (%p328) target = $region56
      $region55: #{tpu_custom_call.1} parent=5 // pred_region
        // Predicated region
        $region57: #{tpu_custom_call.1} parent=55 // pred_check
          %p331 = pneg %p40
        $region58: #{tpu_custom_call.1} parent=55 // pred_check_branch
          %333 = sbr.rel (%p331) target = $region60
        $region59: #{tpu_custom_call.1} parent=55 // pred_region
          %p334 = scmp.lt.s32.totalorder %s20, 1
          %s335 = scalar_select %p334, %s20, 1
          %s336 = smul.addr %s335, 2
          %s337 = smul.addr %s336, 8
          %s338 = scalar_lea.vmem %s0, %s337
        $region60: #{tpu_custom_call.1} parent=55 // pred_fallthru
          _
      $region56: #{tpu_custom_call.1} parent=5 // pred_fallthru
        _
      %p339 = scmp.le.s32.totalorder 1, %s20
      %p340 = scmp.lt.s32.totalorder %s20, 3
      %p341 = pnand %p339, %p340
      %p342 = pneg %p341
      // Predicated region
      $region61: #{tpu_custom_call.1} parent=5 // pred_check
        _
      $region62: #{tpu_custom_call.1} parent=5 // pred_check_branch
        %344 = sbr.rel (%p341) target = $region64
      $region63: #{tpu_custom_call.1} parent=5 // pred_region
        %s345 = ssub.s32 %s20, 1
        %p346 = scmp.lt.s32.totalorder %s25, 1
        %s347 = scalar_select %p346, %s25, 1
        %s348 = smul.addr %s347, 2
        %s349 = smul.addr %s348, 8
        %s350 = scalar_lea.vmem %s0, %s349
        %p351 = pneg %p46
        %p352 = pneg %p43
        %p353 = pneg %p67
        %p354 = pneg %p64
        %p355 = pneg %p88
        %p356 = pneg %p85
        %p357 = pneg %p109
        %p358 = pneg %p106
        %p359 = pneg %p130
        %p360 = pneg %p127
        %p361 = pneg %p151
        %p362 = pneg %p148
        %p363 = pneg %p172
        %p364 = pneg %p169
        %p365 = pneg %p193
        %p366 = pneg %p190
        %p367 = pneg %p214
        %p368 = pneg %p211
        %p369 = pneg %p235
        %p370 = pneg %p232
        %p371 = pneg %p256
        %p372 = pneg %p253
        %p373 = pneg %p282
        %p374 = pneg %p279
        %s375 = sand.u32 %s269, 1
        %s376 = scalar_lea.sflag [#allocation4], %s375
        %s377 = sand.u32 %s269, 1
        %s378 = smul.addr %s377, 16
        %s379 = scalar_lea.vmem [#allocation3], %s378
        %p380 = scmp.lt.s32.totalorder %s25, 1
        %s381 = scalar_select %p380, %s25, 1
        %s382 = smul.addr %s381, 2
        %s383 = smul.addr %s382, 8
        %s384 = scalar_lea.vmem %s0, %s383
        %v386 = vld [vmem:[%s384] sm:$0xff]
        %v387 = vld [vmem:[%s384 + $0x8] sm:$0xff]
        %v388 = vld [vmem:[%s1] sm:$0x1]
        %v389 = vld [vmem:[%s2] sm:$0x1]
        %vm390 = vcmask 261120
        %v391 = vsel %vm390, %v386, 0.0
        %392 = vadd.xlane.f32.xlu0 %v391
        %v393 = vpop.xlane.xlu0 %392
        %v394 = vsel %vm390, %v387, 0.0
        %395 = vadd.xlane.f32.xlu0 %v394
        %v396 = vpop.xlane.xlu0 %395
        %v397 = vrcp.pop 32.0
        %v398 = vmul.f32 %v393, %v397
        %v399 = vmul.f32 %v396, %v397
        %v400 = vsub.f32 %v386, %v398
        %v401 = vsub.f32 %v387, %v399
        %v402 = vmul.f32 %v400, %v400
        %v403 = vmul.f32 %v401, %v401
        %v404 = vsel %vm390, %v402, 0.0
        %405 = vadd.xlane.f32.xlu0 %v404
        %v406 = vpop.xlane.xlu0 %405
        %v407 = vsel %vm390, %v403, 0.0
        %408 = vadd.xlane.f32.xlu0 %v407
        %v409 = vpop.xlane.xlu0 %408
        %v410 = vmul.f32 %v406, %v397
        %v411 = vmul.f32 %v409, %v397
        %v412 = vadd.f32 %v410, 1e-05
        %v413 = vadd.f32 %v411, 1e-05
        %v414 = vrsqrt.pop %v412
        %v415 = vrsqrt.pop %v413
        %v416 = vmul.f32 %v400, %v414
        %v417 = vmul.f32 %v401, %v415
        %v419 = vlaneseq
        %v420 = vshrl.u32 %v419, 7
        %v421 = vsub.s32 0, %v420
        %v422 = vrot.slane %v388, %v421
        %v424 = vmul.f32 %v416, %v422
        %v425 = vmul.f32 %v417, %v422
        %v427 = vlaneseq
        %v428 = vshrl.u32 %v427, 7
        %v429 = vsub.s32 0, %v428
        %v430 = vrot.slane %v389, %v429
        %v432 = vadd.f32 %v424, %v430
        %v433 = vadd.f32 %v425, %v430
        %v434 = vpack.c.bf16 %v433, %v432
        %v435 = vld [vmem:[%s3] sm:$0xf]
        %v436 = vld [vmem:[%s3 + $0x4] sm:$0xf]
        %v437 = vld [vmem:[%s3 + $0x8] sm:$0xf]
        %v438 = vld [vmem:[%s3 + $0xc] sm:$0xf]
        %v443 = vunpack.c.l.b16 %v435
        %v444 = vunpack.c.l.b16 %v436
        %v445 = vunpack.c.l.b16 %v437
        %v446 = vunpack.c.l.b16 %v438
        %v447 = vpack.c.b16 %v444, %v443
        %v448 = vpack.c.b16 %v446, %v445
        %v452 = vsel %vm390, %v434, 0
        %454 = vmatprep.subr.bf16.mxu0 0
        %455 = vmatpush1.bf16.msra.mxu0 %v447
        %456 = vmatprep.subr.bf16.mxu0 0
        %457 = vmatpush1.bf16.msra.mxu0 %v448
        %458 = vmatprep.subr.bf16.mxu0 0
        %459 = vmatpush1.bf16.msra.mxu0 0
        %460 = vmatprep.subr.bf16.mxu0 0
        %461 = vmatpush1.bf16.msra.mxu0 0
        %462 = vmatprep.subr.bf16.mxu0 0
        %463 = vmatpush1.bf16.msra.mxu0 0
        %464 = vmatprep.subr.bf16.mxu0 0
        %465 = vmatpush1.bf16.msra.mxu0 0
        %466 = vmatprep.subr.bf16.mxu0 0
        %467 = vmatpush1.bf16.msra.mxu0 0
        %468 = vmatprep.subr.bf16.mxu0 0
        %469 = vmatpush1.bf16.msra.mxu0 0
        %470 = vmatprep.subr.bf16.mxu0 0
        %471 = vmatpush1.bf16.msra.mxu0 0
        %472 = vmatprep.subr.bf16.mxu0 0
        %473 = vmatpush1.bf16.msra.mxu0 0
        %474 = vmatprep.subr.bf16.mxu0 0
        %475 = vmatpush1.bf16.msra.mxu0 0
        %476 = vmatprep.subr.bf16.mxu0 0
        %477 = vmatpush1.bf16.msra.mxu0 0
        %478 = vmatprep.subr.bf16.mxu0 0
        %479 = vmatpush1.bf16.msra.mxu0 0
        %480 = vmatprep.subr.bf16.mxu0 0
        %481 = vmatpush1.bf16.msra.mxu0 0
        %482 = vmatprep.subr.bf16.mxu0 0
        %483 = vmatpush1.bf16.msra.mxu0 0
        %484 = vmatprep.subr.bf16.mxu0 0
        %485 = vmatpush1.bf16.msra.mxu0 0
        %486 = vmatprep.mubr.bf16.mxu0 0
        %487 = vmatmul.mubr.bf16.gmra.mrb[0].mxu0 %v452
        %v488 = vpop.f32.mrb[0].mxu0
        %v489 = vadd.f32 0.0, %v488
        %v490 = vpop.f32.mrb[0].mxu0
        %v491 = vpop.f32.mrb[0].mxu0
        %v492 = vadd.f32 0.0, %v491
        %v493 = vpop.f32.mrb[0].mxu0
        %494 = vdwg.mxu0
        %497 = vrot.lane.b32.xlu0 %v489, 112
        %v498 = vpop.permute.xlu0 %497
        %499 = vrot.lane.b32.xlu0 %v492, 112
        %v500 = vpop.permute.xlu0 %499
        %v503 = vmul.f32 %v489, 0.25
        %v504 = vmul.f32 %v492, 0.25
        %v505 = vmul.f32 %v498, 0.25
        %v506 = vmul.f32 %v500, 0.25
        %v507 = vpack.c.bf16 %v504, %v503
        %v508 = vpack.c.bf16 %v506, %v505
        %vm509 = vcmask 130048
        %510 = vst.msk [vmem:[#allocation2] sm:$0xff] %vm509, %v507
        %511 = vst.msk [vmem:[#allocation2 + $0x8] sm:$0xff] %vm509, %v508
        %v512 = vpack.c.bf16 %v492, %v489
        %v513 = vpack.c.bf16 %v500, %v498
        %v514 = vld [vmem:[%s4] sm:$0x1]
        %v515 = vld [vmem:[%s4 + $0x1] sm:$0x1]
        %v516 = vld [vmem:[%s5] sm:$0x1]
        %v517 = vld [vmem:[%s5 + $0x1] sm:$0x1]
        %v518 = vld [vmem:[%s6] sm:$0xf]
        %v519 = vld [vmem:[%s6 + $0x4] sm:$0xf]
        %v520 = vld [vmem:[%s6 + $0x8] sm:$0xf]
        %v521 = vld [vmem:[%s6 + $0xc] sm:$0xf]
        %v522 = vld [vmem:[%s9] sm:$0xf]
        %v523 = vld [vmem:[%s9 + $0x4] sm:$0xf]
        %v524 = vld [vmem:[%s9 + $0x8] sm:$0xf]
        %v525 = vld [vmem:[%s9 + $0xc] sm:$0xf]
        %v526 = vld [vmem:[%s10] sm:$0xf]
        %v527 = vld [vmem:[%s10 + $0x4] sm:$0xf]
        %v528 = vld [vmem:[%s10 + $0x8] sm:$0xf]
        %v529 = vld [vmem:[%s10 + $0xc] sm:$0xf]
        %v530 = vld [vmem:[%s10 + $0x10] sm:$0xf]
        %v531 = vld [vmem:[%s10 + $0x14] sm:$0xf]
        %v532 = vld [vmem:[%s10 + $0x18] sm:$0xf]
        %v533 = vld [vmem:[%s10 + $0x1c] sm:$0xf]
        %v534 = vld [vmem:[%s10 + $0x20] sm:$0xf]
        %v535 = vld [vmem:[%s10 + $0x24] sm:$0xf]
        %v536 = vld [vmem:[%s10 + $0x28] sm:$0xf]
        %v537 = vld [vmem:[%s10 + $0x2c] sm:$0xf]
        %v538 = vld [vmem:[%s10 + $0x30] sm:$0xf]
        %v539 = vld [vmem:[%s10 + $0x34] sm:$0xf]
        %v540 = vld [vmem:[%s10 + $0x38] sm:$0xf]
        %v541 = vld [vmem:[%s10 + $0x3c] sm:$0xf]
        %v542 = vld [vmem:[%s7] sm:$0x1]
        %v543 = vld [vmem:[%s8] sm:$0x1]
        %v544 = vld [vmem:[#allocation2] sm:$0xff]
        %v545 = vld [vmem:[#allocation2 + $0x8] sm:$0xff]
        %547 = vrot.lane.b32.xlu0 %v512, 96
        %v548 = vpop.permute.xlu0 %547
        %v550 = vsel %vm509, %v544, 0
        %v553 = vsel %vm509, %v548, 0
        %555 = vmatprep.subr.bf16.mxu0 0
        %556 = vmatpush1.bf16.xpose.msra.mxu0 %v553
        %557 = vmatprep.subr.bf16.mxu0 0
        %558 = vmatpush1.bf16.xpose.msra.mxu0 0
        %559 = vmatprep.subr.bf16.mxu0 0
        %560 = vmatpush1.bf16.xpose.msra.mxu0 0
        %561 = vmatprep.subr.bf16.mxu0 0
        %562 = vmatpush1.bf16.xpose.msra.mxu0 0
        %563 = vmatprep.subr.bf16.mxu0 0
        %564 = vmatpush1.bf16.xpose.msra.mxu0 0
        %565 = vmatprep.subr.bf16.mxu0 0
        %566 = vmatpush1.bf16.xpose.msra.mxu0 0
        %567 = vmatprep.subr.bf16.mxu0 0
        %568 = vmatpush1.bf16.xpose.msra.mxu0 0
        %569 = vmatprep.subr.bf16.mxu0 0
        %570 = vmatpush1.bf16.xpose.msra.mxu0 0
        %571 = vmatprep.subr.bf16.mxu0 0
        %572 = vmatpush1.bf16.xpose.msra.mxu0 0
        %573 = vmatprep.subr.bf16.mxu0 0
        %574 = vmatpush1.bf16.xpose.msra.mxu0 0
        %575 = vmatprep.subr.bf16.mxu0 0
        %576 = vmatpush1.bf16.xpose.msra.mxu0 0
        %577 = vmatprep.subr.bf16.mxu0 0
        %578 = vmatpush1.bf16.xpose.msra.mxu0 0
        %579 = vmatprep.subr.bf16.mxu0 0
        %580 = vmatpush1.bf16.xpose.msra.mxu0 0
        %581 = vmatprep.subr.bf16.mxu0 0
        %582 = vmatpush1.bf16.xpose.msra.mxu0 0
        %583 = vmatprep.subr.bf16.mxu0 0
        %584 = vmatpush1.bf16.xpose.msra.mxu0 0
        %585 = vmatprep.subr.bf16.mxu0 0
        %586 = vmatpush1.bf16.xpose.msra.mxu0 0
        %587 = vmatprep.mubr.bf16.mxu0 0
        %588 = vmatmul.mubr.bf16.gmra.mrb[0].mxu0 %v550
        %v589 = vpop.f32.mrb[0].mxu0
        %v590 = vadd.f32 0.0, %v589
        %v591 = vpop.f32.mrb[0].mxu0
        %v592 = vpop.f32.mrb[0].mxu0
        %v593 = vadd.f32 0.0, %v592
        %v594 = vpop.f32.mrb[0].mxu0
        %595 = vdwg.mxu0
        %597 = vrot.lane.b32.xlu0 %v513, 96
        %v598 = vpop.permute.xlu0 %597
        %v600 = vsel %vm509, %v545, 0
        %v603 = vsel %vm509, %v598, 0
        %605 = vmatprep.subr.bf16.mxu0 0
        %606 = vmatpush1.bf16.xpose.msra.mxu0 %v603
        %607 = vmatprep.subr.bf16.mxu0 0
        %608 = vmatpush1.bf16.xpose.msra.mxu0 0
        %609 = vmatprep.subr.bf16.mxu0 0
        %610 = vmatpush1.bf16.xpose.msra.mxu0 0
        %611 = vmatprep.subr.bf16.mxu0 0
        %612 = vmatpush1.bf16.xpose.msra.mxu0 0
        %613 = vmatprep.subr.bf16.mxu0 0
        %614 = vmatpush1.bf16.xpose.msra.mxu0 0
        %615 = vmatprep.subr.bf16.mxu0 0
        %616 = vmatpush1.bf16.xpose.msra.mxu0 0
        %617 = vmatprep.subr.bf16.mxu0 0
        %618 = vmatpush1.bf16.xpose.msra.mxu0 0
        %619 = vmatprep.subr.bf16.mxu0 0
        %620 = vmatpush1.bf16.xpose.msra.mxu0 0
        %621 = vmatprep.subr.bf16.mxu0 0
        %622 = vmatpush1.bf16.xpose.msra.mxu0 0
        %623 = vmatprep.subr.bf16.mxu0 0
        %624 = vmatpush1.bf16.xpose.msra.mxu0 0
        %625 = vmatprep.subr.bf16.mxu0 0
        %626 = vmatpush1.bf16.xpose.msra.mxu0 0
        %627 = vmatprep.subr.bf16.mxu0 0
        %628 = vmatpush1.bf16.xpose.msra.mxu0 0
        %629 = vmatprep.subr.bf16.mxu0 0
        %630 = vmatpush1.bf16.xpose.msra.mxu0 0
        %631 = vmatprep.subr.bf16.mxu0 0
        %632 = vmatpush1.bf16.xpose.msra.mxu0 0
        %633 = vmatprep.subr.bf16.mxu0 0
        %634 = vmatpush1.bf16.xpose.msra.mxu0 0
        %635 = vmatprep.subr.bf16.mxu0 0
        %636 = vmatpush1.bf16.xpose.msra.mxu0 0
        %637 = vmatprep.mubr.bf16.mxu0 0
        %638 = vmatmul.mubr.bf16.gmra.mrb[0].mxu0 %v600
        %v639 = vpop.f32.mrb[0].mxu0
        %v640 = vadd.f32 0.0, %v639
        %v641 = vpop.f32.mrb[0].mxu0
        %v642 = vpop.f32.mrb[0].mxu0
        %v643 = vadd.f32 0.0, %v642
        %v644 = vpop.f32.mrb[0].mxu0
        %645 = vdwg.mxu0
        %v647 = vsel %vm509, %v514, 0
        %649 = vmatprep.subr.bf16.mxu0 0
        %650 = vmatpush1.bf16.xpose.msra.mxu0 %v647
        %651 = vmatprep.subr.bf16.mxu0 0
        %652 = vmatpush1.bf16.xpose.msra.mxu0 0
        %653 = vmatprep.subr.bf16.mxu0 0
        %654 = vmatpush1.bf16.xpose.msra.mxu0 0
        %655 = vmatprep.subr.bf16.mxu0 0
        %656 = vmatpush1.bf16.xpose.msra.mxu0 0
        %657 = vmatprep.subr.bf16.mxu0 0
        %658 = vmatpush1.bf16.xpose.msra.mxu0 0
        %659 = vmatprep.subr.bf16.mxu0 0
        %660 = vmatpush1.bf16.xpose.msra.mxu0 0
        %661 = vmatprep.subr.bf16.mxu0 0
        %662 = vmatpush1.bf16.xpose.msra.mxu0 0
        %663 = vmatprep.subr.bf16.mxu0 0
        %664 = vmatpush1.bf16.xpose.msra.mxu0 0
        %665 = vmatprep.subr.bf16.mxu0 0
        %666 = vmatpush1.bf16.xpose.msra.mxu0 0
        %667 = vmatprep.subr.bf16.mxu0 0
        %668 = vmatpush1.bf16.xpose.msra.mxu0 0
        %669 = vmatprep.subr.bf16.mxu0 0
        %670 = vmatpush1.bf16.xpose.msra.mxu0 0
        %671 = vmatprep.subr.bf16.mxu0 0
        %672 = vmatpush1.bf16.xpose.msra.mxu0 0
        %673 = vmatprep.subr.bf16.mxu0 0
        %674 = vmatpush1.bf16.xpose.msra.mxu0 0
        %675 = vmatprep.subr.bf16.mxu0 0
        %676 = vmatpush1.bf16.xpose.msra.mxu0 0
        %677 = vmatprep.subr.bf16.mxu0 0
        %678 = vmatpush1.bf16.xpose.msra.mxu0 0
        %679 = vmatprep.subr.bf16.mxu0 0
        %680 = vmatpush1.bf16.xpose.msra.mxu0 0
        %681 = vmatprep.mubr.bf16.mxu0 0
        %682 = vmatmul.mubr.bf16.gmra.mrb[0].mxu0 %v550
        %v683 = vpop.f32.mrb[0].mxu0
        %v684 = vadd.f32 0.0, %v683
        %v685 = vpop.f32.mrb[0].mxu0
        %v686 = vpop.f32.mrb[0].mxu0
        %v687 = vadd.f32 0.0, %v686
        %v688 = vpop.f32.mrb[0].mxu0
        %689 = vdwg.mxu0
        %v691 = vsel %vm509, %v515, 0
        %693 = vmatprep.subr.bf16.mxu0 0
        %694 = vmatpush1.bf16.xpose.msra.mxu0 %v691
        %695 = vmatprep.subr.bf16.mxu0 0
        %696 = vmatpush1.bf16.xpose.msra.mxu0 0
        %697 = vmatprep.subr.bf16.mxu0 0
        %698 = vmatpush1.bf16.xpose.msra.mxu0 0
        %699 = vmatprep.subr.bf16.mxu0 0
        %700 = vmatpush1.bf16.xpose.msra.mxu0 0
        %701 = vmatprep.subr.bf16.mxu0 0
        %702 = vmatpush1.bf16.xpose.msra.mxu0 0
        %703 = vmatprep.subr.bf16.mxu0 0
        %704 = vmatpush1.bf16.xpose.msra.mxu0 0
        %705 = vmatprep.subr.bf16.mxu0 0
        %706 = vmatpush1.bf16.xpose.msra.mxu0 0
        %707 = vmatprep.subr.bf16.mxu0 0
        %708 = vmatpush1.bf16.xpose.msra.mxu0 0
        %709 = vmatprep.subr.bf16.mxu0 0
        %710 = vmatpush1.bf16.xpose.msra.mxu0 0
        %711 = vmatprep.subr.bf16.mxu0 0
        %712 = vmatpush1.bf16.xpose.msra.mxu0 0
        %713 = vmatprep.subr.bf16.mxu0 0
        %714 = vmatpush1.bf16.xpose.msra.mxu0 0
        %715 = vmatprep.subr.bf16.mxu0 0
        %716 = vmatpush1.bf16.xpose.msra.mxu0 0
        %717 = vmatprep.subr.bf16.mxu0 0
        %718 = vmatpush1.bf16.xpose.msra.mxu0 0
        %719 = vmatprep.subr.bf16.mxu0 0
        %720 = vmatpush1.bf16.xpose.msra.mxu0 0
        %721 = vmatprep.subr.bf16.mxu0 0
        %722 = vmatpush1.bf16.xpose.msra.mxu0 0
        %723 = vmatprep.subr.bf16.mxu0 0
        %724 = vmatpush1.bf16.xpose.msra.mxu0 0
        %725 = vmatprep.mubr.bf16.mxu0 0
        %726 = vmatmul.mubr.bf16.gmra.mrb[0].mxu0 %v600
        %v727 = vpop.f32.mrb[0].mxu0
        %v728 = vadd.f32 0.0, %v727
        %v729 = vpop.f32.mrb[0].mxu0
        %v730 = vpop.f32.mrb[0].mxu0
        %v731 = vadd.f32 0.0, %v730
        %v732 = vpop.f32.mrb[0].mxu0
        %733 = vdwg.mxu0
        %v734 = vsel %vm509, %v590, -inf
        %735 = vmax.xlane.f32.xlu0 %v734
        %v736 = vpop.xlane.xlu0 %735
        %v737 = vsel %vm509, %v593, -inf
        %738 = vmax.xlane.f32.xlu0 %v737
        %v739 = vpop.xlane.xlu0 %738
        %v740 = vsel %vm509, %v640, -inf
        %741 = vmax.xlane.f32.xlu0 %v740
        %v742 = vpop.xlane.xlu0 %741
        %v743 = vsel %vm509, %v643, -inf
        %744 = vmax.xlane.f32.xlu0 %v743
        %v745 = vpop.xlane.xlu0 %744
        %vm746 = vcmask 15360
        %v747 = vsel %vm746, %v684, -inf
        %748 = vmax.xlane.f32.xlu0 %v747
        %v749 = vpop.xlane.xlu0 %748
        %v750 = vsel %vm746, %v687, -inf
        %751 = vmax.xlane.f32.xlu0 %v750
        %v752 = vpop.xlane.xlu0 %751
        %v753 = vsel %vm746, %v728, -inf
        %754 = vmax.xlane.f32.xlu0 %v753
        %v755 = vpop.xlane.xlu0 %754
        %v756 = vsel %vm746, %v731, -inf
        %757 = vmax.xlane.f32.xlu0 %v756
        %v758 = vpop.xlane.xlu0 %757
        %v759 = vmax.f32 %v736, %v749
        %v760 = vmax.f32 %v739, %v752
        %v761 = vmax.f32 %v742, %v755
        %v762 = vmax.f32 %v745, %v758
        %v763 = vsub.f32 %v590, %v759
        %v764 = vsub.f32 %v593, %v760
        %v765 = vsub.f32 %v640, %v761
        %v766 = vsub.f32 %v643, %v762
        %v767 = vmul.f32 %v763, 1.442695
        %v768 = vpow.pop %v767
        %v769 = vmul.f32 %v764, 1.442695
        %v770 = vpow.pop %v769
        %v771 = vmul.f32 %v765, 1.442695
        %v772 = vpow.pop %v771
        %v773 = vmul.f32 %v766, 1.442695
        %v774 = vpow.pop %v773
        %v775 = vsub.f32 %v684, %v759
        %v776 = vsub.f32 %v687, %v760
        %v777 = vsub.f32 %v728, %v761
        %v778 = vsub.f32 %v731, %v762
        %v779 = vmul.f32 %v775, 1.442695
        %v780 = vpow.pop %v779
        %v781 = vmul.f32 %v776, 1.442695
        %v782 = vpow.pop %v781
        %v783 = vmul.f32 %v777, 1.442695
        %v784 = vpow.pop %v783
        %v785 = vmul.f32 %v778, 1.442695
        %v786 = vpow.pop %v785
        %v787 = vsel %vm509, %v768, 0.0
        %788 = vadd.xlane.f32.xlu0 %v787
        %v789 = vpop.xlane.xlu0 %788
        %v790 = vsel %vm509, %v770, 0.0
        %791 = vadd.xlane.f32.xlu0 %v790
        %v792 = vpop.xlane.xlu0 %791
        %v793 = vsel %vm509, %v772, 0.0
        %794 = vadd.xlane.f32.xlu0 %v793
        %v795 = vpop.xlane.xlu0 %794
        %v796 = vsel %vm509, %v774, 0.0
        %797 = vadd.xlane.f32.xlu0 %v796
        %v798 = vpop.xlane.xlu0 %797
        %v799 = vsel %vm746, %v780, 0.0
        %800 = vadd.xlane.f32.xlu0 %v799
        %v801 = vpop.xlane.xlu0 %800
        %v802 = vsel %vm746, %v782, 0.0
        %803 = vadd.xlane.f32.xlu0 %v802
        %v804 = vpop.xlane.xlu0 %803
        %v805 = vsel %vm746, %v784, 0.0
        %806 = vadd.xlane.f32.xlu0 %v805
        %v807 = vpop.xlane.xlu0 %806
        %v808 = vsel %vm746, %v786, 0.0
        %809 = vadd.xlane.f32.xlu0 %v808
        %v810 = vpop.xlane.xlu0 %809
        %v811 = vadd.f32 %v789, %v801
        %v812 = vadd.f32 %v792, %v804
        %v813 = vadd.f32 %v795, %v807
        %v814 = vadd.f32 %v798, %v810
        %v815 = vpack.c.bf16 %v770, %v768
        %v816 = vpack.c.bf16 %v774, %v772
        %v817 = vpack.c.bf16 %v782, %v780
        %v818 = vpack.c.bf16 %v786, %v784
        %v820 = vsel %vm746, %v817, 0
        %vm822 = vcmask 1040384
        %v824 = vsel %vm822, %v516, 0
        %826 = vmatprep.subr.bf16.mxu0 0
        %827 = vmatpush1.bf16.msra.mxu0 %v824
        %828 = vmatprep.subr.bf16.mxu0 0
        %829 = vmatpush1.bf16.msra.mxu0 0
        %830 = vmatprep.subr.bf16.mxu0 0
        %831 = vmatpush1.bf16.msra.mxu0 0
        %832 = vmatprep.subr.bf16.mxu0 0
        %833 = vmatpush1.bf16.msra.mxu0 0
        %834 = vmatprep.subr.bf16.mxu0 0
        %835 = vmatpush1.bf16.msra.mxu0 0
        %836 = vmatprep.subr.bf16.mxu0 0
        %837 = vmatpush1.bf16.msra.mxu0 0
        %838 = vmatprep.subr.bf16.mxu0 0
        %839 = vmatpush1.bf16.msra.mxu0 0
        %840 = vmatprep.subr.bf16.mxu0 0
        %841 = vmatpush1.bf16.msra.mxu0 0
        %842 = vmatprep.subr.bf16.mxu0 0
        %843 = vmatpush1.bf16.msra.mxu0 0
        %844 = vmatprep.subr.bf16.mxu0 0
        %845 = vmatpush1.bf16.msra.mxu0 0
        %846 = vmatprep.subr.bf16.mxu0 0
        %847 = vmatpush1.bf16.msra.mxu0 0
        %848 = vmatprep.subr.bf16.mxu0 0
        %849 = vmatpush1.bf16.msra.mxu0 0
        %850 = vmatprep.subr.bf16.mxu0 0
        %851 = vmatpush1.bf16.msra.mxu0 0
        %852 = vmatprep.subr.bf16.mxu0 0
        %853 = vmatpush1.bf16.msra.mxu0 0
        %854 = vmatprep.subr.bf16.mxu0 0
        %855 = vmatpush1.bf16.msra.mxu0 0
        %856 = vmatprep.subr.bf16.mxu0 0
        %857 = vmatpush1.bf16.msra.mxu0 0
        %858 = vmatprep.mubr.bf16.mxu0 0
        %859 = vmatmul.mubr.bf16.gmra.mrb[0].mxu0 %v820
        %v860 = vpop.f32.mrb[0].mxu0
        %v861 = vadd.f32 0.0, %v860
        %v862 = vpop.f32.mrb[0].mxu0
        %v863 = vpop.f32.mrb[0].mxu0
        %v864 = vadd.f32 0.0, %v863
        %v865 = vpop.f32.mrb[0].mxu0
        %866 = vdwg.mxu0
        %v868 = vsel %vm746, %v818, 0
        %v871 = vsel %vm822, %v517, 0
        %873 = vmatprep.subr.bf16.mxu0 0
        %874 = vmatpush1.bf16.msra.mxu0 %v871
        %875 = vmatprep.subr.bf16.mxu0 0
        %876 = vmatpush1.bf16.msra.mxu0 0
        %877 = vmatprep.subr.bf16.mxu0 0
        %878 = vmatpush1.bf16.msra.mxu0 0
        %879 = vmatprep.subr.bf16.mxu0 0
        %880 = vmatpush1.bf16.msra.mxu0 0
        %881 = vmatprep.subr.bf16.mxu0 0
        %882 = vmatpush1.bf16.msra.mxu0 0
        %883 = vmatprep.subr.bf16.mxu0 0
        %884 = vmatpush1.bf16.msra.mxu0 0
        %885 = vmatprep.subr.bf16.mxu0 0
        %886 = vmatpush1.bf16.msra.mxu0 0
        %887 = vmatprep.subr.bf16.mxu0 0
        %888 = vmatpush1.bf16.msra.mxu0 0
        %889 = vmatprep.subr.bf16.mxu0 0
        %890 = vmatpush1.bf16.msra.mxu0 0
        %891 = vmatprep.subr.bf16.mxu0 0
        %892 = vmatpush1.bf16.msra.mxu0 0
        %893 = vmatprep.subr.bf16.mxu0 0
        %894 = vmatpush1.bf16.msra.mxu0 0
        %895 = vmatprep.subr.bf16.mxu0 0
        %896 = vmatpush1.bf16.msra.mxu0 0
        %897 = vmatprep.subr.bf16.mxu0 0
        %898 = vmatpush1.bf16.msra.mxu0 0
        %899 = vmatprep.subr.bf16.mxu0 0
        %900 = vmatpush1.bf16.msra.mxu0 0
        %901 = vmatprep.subr.bf16.mxu0 0
        %902 = vmatpush1.bf16.msra.mxu0 0
        %903 = vmatprep.subr.bf16.mxu0 0
        %904 = vmatpush1.bf16.msra.mxu0 0
        %905 = vmatprep.mubr.bf16.mxu0 0
        %906 = vmatmul.mubr.bf16.gmra.mrb[0].mxu0 %v868
        %v907 = vpop.f32.mrb[0].mxu0
        %v908 = vadd.f32 0.0, %v907
        %v909 = vpop.f32.mrb[0].mxu0
        %v910 = vpop.f32.mrb[0].mxu0
        %v911 = vadd.f32 0.0, %v910
        %v912 = vpop.f32.mrb[0].mxu0
        %913 = vdwg.mxu0
        %914 = vrot.lane.b32.xlu0 %v512, 64
        %v915 = vpop.permute.xlu0 %914
        %v918 = vsel %vm509, %v815, 0
        %920 = vmatprep.subr.bf16.mxu0 0
        %921 = vmatpush1.bf16.msra.mxu0 %v915
        %922 = vmatprep.subr.bf16.mxu0 0
        %923 = vmatpush1.bf16.msra.mxu0 0
        %924 = vmatprep.subr.bf16.mxu0 0
        %925 = vmatpush1.bf16.msra.mxu0 0
        %926 = vmatprep.subr.bf16.mxu0 0
        %927 = vmatpush1.bf16.msra.mxu0 0
        %928 = vmatprep.subr.bf16.mxu0 0
        %929 = vmatpush1.bf16.msra.mxu0 0
        %930 = vmatprep.subr.bf16.mxu0 0
        %931 = vmatpush1.bf16.msra.mxu0 0
        %932 = vmatprep.subr.bf16.mxu0 0
        %933 = vmatpush1.bf16.msra.mxu0 0
        %934 = vmatprep.subr.bf16.mxu0 0
        %935 = vmatpush1.bf16.msra.mxu0 0
        %936 = vmatprep.subr.bf16.mxu0 0
        %937 = vmatpush1.bf16.msra.mxu0 0
        %938 = vmatprep.subr.bf16.mxu0 0
        %939 = vmatpush1.bf16.msra.mxu0 0
        %940 = vmatprep.subr.bf16.mxu0 0
        %941 = vmatpush1.bf16.msra.mxu0 0
        %942 = vmatprep.subr.bf16.mxu0 0
        %943 = vmatpush1.bf16.msra.mxu0 0
        %944 = vmatprep.subr.bf16.mxu0 0
        %945 = vmatpush1.bf16.msra.mxu0 0
        %946 = vmatprep.subr.bf16.mxu0 0
        %947 = vmatpush1.bf16.msra.mxu0 0
        %948 = vmatprep.subr.bf16.mxu0 0
        %949 = vmatpush1.bf16.msra.mxu0 0
        %950 = vmatprep.subr.bf16.mxu0 0
        %951 = vmatpush1.bf16.msra.mxu0 0
        %952 = vmatprep.mubr.bf16.mxu0 0
        %953 = vmatmul.mubr.bf16.gmra.mrb[0].mxu0 %v918
        %v954 = vpop.f32.mrb[0].mxu0
        %v955 = vadd.f32 %v861, %v954
        %v956 = vpop.f32.mrb[0].mxu0
        %v957 = vpop.f32.mrb[0].mxu0
        %v958 = vadd.f32 %v864, %v957
        %v959 = vpop.f32.mrb[0].mxu0
        %960 = vdwg.mxu0
        %961 = vrot.lane.b32.xlu0 %v513, 64
        %v962 = vpop.permute.xlu0 %961
        %v965 = vsel %vm509, %v816, 0
        %967 = vmatprep.subr.bf16.mxu0 0
        %968 = vmatpush1.bf16.msra.mxu0 %v962
        %969 = vmatprep.subr.bf16.mxu0 0
        %970 = vmatpush1.bf16.msra.mxu0 0
        %971 = vmatprep.subr.bf16.mxu0 0
        %972 = vmatpush1.bf16.msra.mxu0 0
        %973 = vmatprep.subr.bf16.mxu0 0
        %974 = vmatpush1.bf16.msra.mxu0 0
        %975 = vmatprep.subr.bf16.mxu0 0
        %976 = vmatpush1.bf16.msra.mxu0 0
        %977 = vmatprep.subr.bf16.mxu0 0
        %978 = vmatpush1.bf16.msra.mxu0 0
        %979 = vmatprep.subr.bf16.mxu0 0
        %980 = vmatpush1.bf16.msra.mxu0 0
        %981 = vmatprep.subr.bf16.mxu0 0
        %982 = vmatpush1.bf16.msra.mxu0 0
        %983 = vmatprep.subr.bf16.mxu0 0
        %984 = vmatpush1.bf16.msra.mxu0 0
        %985 = vmatprep.subr.bf16.mxu0 0
        %986 = vmatpush1.bf16.msra.mxu0 0
        %987 = vmatprep.subr.bf16.mxu0 0
        %988 = vmatpush1.bf16.msra.mxu0 0
        %989 = vmatprep.subr.bf16.mxu0 0
        %990 = vmatpush1.bf16.msra.mxu0 0
        %991 = vmatprep.subr.bf16.mxu0 0
        %992 = vmatpush1.bf16.msra.mxu0 0
        %993 = vmatprep.subr.bf16.mxu0 0
        %994 = vmatpush1.bf16.msra.mxu0 0
        %995 = vmatprep.subr.bf16.mxu0 0
        %996 = vmatpush1.bf16.msra.mxu0 0
        %997 = vmatprep.subr.bf16.mxu0 0
        %998 = vmatpush1.bf16.msra.mxu0 0
        %999 = vmatprep.mubr.bf16.mxu0 0
        %1000 = vmatmul.mubr.bf16.gmra.mrb[0].mxu0 %v965
        %v1001 = vpop.f32.mrb[0].mxu0
        %v1002 = vadd.f32 %v908, %v1001
        %v1003 = vpop.f32.mrb[0].mxu0
        %v1004 = vpop.f32.mrb[0].mxu0
        %v1005 = vadd.f32 %v911, %v1004
        %v1006 = vpop.f32.mrb[0].mxu0
        %1007 = vdwg.mxu0
        %v1008 = vrcp.pop %v811
        %v1009 = vrcp.pop %v812
        %v1010 = vrcp.pop %v813
        %v1011 = vrcp.pop %v814
        %v1012 = vmul.f32 %v955, %v1008
        %v1013 = vmul.f32 %v958, %v1009
        %v1014 = vmul.f32 %v1002, %v1010
        %v1015 = vmul.f32 %v1005, %v1011
        %1018 = vrot.lane.b32.xlu0 %v1014, 16
        %v1019 = vpop.permute.xlu0 %1018
        %1020 = vrot.lane.b32.xlu0 %v1015, 16
        %v1021 = vpop.permute.xlu0 %1020
        %v1024 = vsel %vm509, %v1012, %v1019
        %v1025 = vsel %vm509, %v1013, %v1021
        %v1026 = vpack.c.bf16 %v1025, %v1024
        %v1027 = vld [vmem:[%s384] sm:$0xff]
        %v1028 = vld [vmem:[%s384 + $0x8] sm:$0xff]
        %v1033 = vunpack.c.l.b16 %v518
        %v1034 = vunpack.c.l.b16 %v519
        %v1035 = vunpack.c.l.b16 %v520
        %v1036 = vunpack.c.l.b16 %v521
        %v1037 = vpack.c.b16 %v1034, %v1033
        %v1038 = vpack.c.b16 %v1036, %v1035
        %v1042 = vsel %vm390, %v1026, 0
        %1044 = vmatprep.subr.bf16.mxu0 0
        %1045 = vmatpush1.bf16.msra.mxu0 %v1037
        %1046 = vmatprep.subr.bf16.mxu0 0
        %1047 = vmatpush1.bf16.msra.mxu0 %v1038
        %1048 = vmatprep.subr.bf16.mxu0 0
        %1049 = vmatpush1.bf16.msra.mxu0 0
        %1050 = vmatprep.subr.bf16.mxu0 0
        %1051 = vmatpush1.bf16.msra.mxu0 0
        %1052 = vmatprep.subr.bf16.mxu0 0
        %1053 = vmatpush1.bf16.msra.mxu0 0
        %1054 = vmatprep.subr.bf16.mxu0 0
        %1055 = vmatpush1.bf16.msra.mxu0 0
        %1056 = vmatprep.subr.bf16.mxu0 0
        %1057 = vmatpush1.bf16.msra.mxu0 0
        %1058 = vmatprep.subr.bf16.mxu0 0
        %1059 = vmatpush1.bf16.msra.mxu0 0
        %1060 = vmatprep.subr.bf16.mxu0 0
        %1061 = vmatpush1.bf16.msra.mxu0 0
        %1062 = vmatprep.subr.bf16.mxu0 0
        %1063 = vmatpush1.bf16.msra.mxu0 0
        %1064 = vmatprep.subr.bf16.mxu0 0
        %1065 = vmatpush1.bf16.msra.mxu0 0
        %1066 = vmatprep.subr.bf16.mxu0 0
        %1067 = vmatpush1.bf16.msra.mxu0 0
        %1068 = vmatprep.subr.bf16.mxu0 0
        %1069 = vmatpush1.bf16.msra.mxu0 0
        %1070 = vmatprep.subr.bf16.mxu0 0
        %1071 = vmatpush1.bf16.msra.mxu0 0
        %1072 = vmatprep.subr.bf16.mxu0 0
        %1073 = vmatpush1.bf16.msra.mxu0 0
        %1074 = vmatprep.subr.bf16.mxu0 0
        %1075 = vmatpush1.bf16.msra.mxu0 0
        %1076 = vmatprep.mubr.bf16.mxu0 0
        %1077 = vmatmul.mubr.bf16.gmra.mrb[0].mxu0 %v1042
        %v1078 = vpop.f32.mrb[0].mxu0
        %v1079 = vadd.f32 %v1027, %v1078
        %v1080 = vpop.f32.mrb[0].mxu0
        %v1081 = vpop.f32.mrb[0].mxu0
        %v1082 = vadd.f32 %v1028, %v1081
        %v1083 = vpop.f32.mrb[0].mxu0
        %1084 = vdwg.mxu0
        %v1085 = vsel %vm390, %v1079, 0.0
        %1086 = vadd.xlane.f32.xlu0 %v1085
        %v1087 = vpop.xlane.xlu0 %1086
        %v1088 = vsel %vm390, %v1082, 0.0
        %1089 = vadd.xlane.f32.xlu0 %v1088
        %v1090 = vpop.xlane.xlu0 %1089
        %v1091 = vmul.f32 %v1087, %v397
        %v1092 = vmul.f32 %v1090, %v397
        %v1093 = vsub.f32 %v1079, %v1091
        %v1094 = vsub.f32 %v1082, %v1092
        %v1095 = vmul.f32 %v1093, %v1093
        %v1096 = vmul.f32 %v1094, %v1094
        %v1097 = vsel %vm390, %v1095, 0.0
        %1098 = vadd.xlane.f32.xlu0 %v1097
        %v1099 = vpop.xlane.xlu0 %1098
        %v1100 = vsel %vm390, %v1096, 0.0
        %1101 = vadd.xlane.f32.xlu0 %v1100
        %v1102 = vpop.xlane.xlu0 %1101
        %v1103 = vmul.f32 %v1099, %v397
        %v1104 = vmul.f32 %v1102, %v397
        %v1105 = vadd.f32 %v1103, 1e-05
        %v1106 = vadd.f32 %v1104, 1e-05
        %v1107 = vrsqrt.pop %v1105
        %v1108 = vrsqrt.pop %v1106
        %v1109 = vmul.f32 %v1093, %v1107
        %v1110 = vmul.f32 %v1094, %v1108
        %v1112 = vlaneseq
        %v1113 = vshrl.u32 %v1112, 7
        %v1114 = vsub.s32 0, %v1113
        %v1115 = vrot.slane %v542, %v1114
        %v1117 = vmul.f32 %v1109, %v1115
        %v1118 = vmul.f32 %v1110, %v1115
        %v1120 = vlaneseq
        %v1121 = vshrl.u32 %v1120, 7
        %v1122 = vsub.s32 0, %v1121
        %v1123 = vrot.slane %v543, %v1122
        %v1125 = vadd.f32 %v1117, %v1123
        %v1126 = vadd.f32 %v1118, %v1123
        %v1127 = vpack.c.bf16 %v1126, %v1125
        %v1132 = vunpack.c.l.b16 %v522
        %v1133 = vunpack.c.l.b16 %v523
        %v1134 = vunpack.c.l.b16 %v524
        %v1135 = vunpack.c.l.b16 %v525
        %v1136 = vpack.c.b16 %v1133, %v1132
        %v1137 = vpack.c.b16 %v1135, %v1134
        %v1141 = vsel %vm390, %v1127, 0
        %1143 = vmatprep.subr.bf16.mxu0 0
        %1144 = vmatpush1.bf16.msra.mxu0 %v1136
        %1145 = vmatprep.subr.bf16.mxu0 0
        %1146 = vmatpush1.bf16.msra.mxu0 %v1137
        %1147 = vmatprep.subr.bf16.mxu0 0
        %1148 = vmatpush1.bf16.msra.mxu0 0
        %1149 = vmatprep.subr.bf16.mxu0 0
        %1150 = vmatpush1.bf16.msra.mxu0 0
        %1151 = vmatprep.subr.bf16.mxu0 0
        %1152 = vmatpush1.bf16.msra.mxu0 0
        %1153 = vmatprep.subr.bf16.mxu0 0
        %1154 = vmatpush1.bf16.msra.mxu0 0
        %1155 = vmatprep.subr.bf16.mxu0 0
        %1156 = vmatpush1.bf16.msra.mxu0 0
        %1157 = vmatprep.subr.bf16.mxu0 0
        %1158 = vmatpush1.bf16.msra.mxu0 0
        %1159 = vmatprep.subr.bf16.mxu0 0
        %1160 = vmatpush1.bf16.msra.mxu0 0
        %1161 = vmatprep.subr.bf16.mxu0 0
        %1162 = vmatpush1.bf16.msra.mxu0 0
        %1163 = vmatprep.subr.bf16.mxu0 0
        %1164 = vmatpush1.bf16.msra.mxu0 0
        %1165 = vmatprep.subr.bf16.mxu0 0
        %1166 = vmatpush1.bf16.msra.mxu0 0
        %1167 = vmatprep.subr.bf16.mxu0 0
        %1168 = vmatpush1.bf16.msra.mxu0 0
        %1169 = vmatprep.subr.bf16.mxu0 0
        %1170 = vmatpush1.bf16.msra.mxu0 0
        %1171 = vmatprep.subr.bf16.mxu0 0
        %1172 = vmatpush1.bf16.msra.mxu0 0
        %1173 = vmatprep.subr.bf16.mxu0 0
        %1174 = vmatpush1.bf16.msra.mxu0 0
        %1175 = vmatprep.mubr.bf16.mxu0 0
        %1176 = vmatmul.mubr.bf16.gmra.mrb[0].mxu0 %v1141
        %v1177 = vpop.f32.mrb[0].mxu0
        %v1178 = vadd.f32 0.0, %v1177
        %v1179 = vpop.f32.mrb[0].mxu0
        %v1180 = vpop.f32.mrb[0].mxu0
        %v1181 = vadd.f32 0.0, %v1180
        %v1182 = vpop.f32.mrb[0].mxu0
        %1183 = vdwg.mxu0
        %v1184 = vmul.f32 %v1178, 0.5
        %v1185 = vmul.f32 %v1181, 0.5
        %v1186 = vmul.f32 %v1178, 0.70710677
        %v1187 = vmul.f32 %v1181, 0.70710677
        %v1188 = verf.f32.pop %v1186
        %v1189 = verf.f32.pop %v1187
        %v1190 = vadd.f32 %v1188, 1.0
        %v1191 = vadd.f32 %v1189, 1.0
        %v1192 = vmul.f32 %v1184, %v1190
        %v1193 = vmul.f32 %v1185, %v1191
        %v1194 = vpack.c.bf16 %v1193, %v1192
        %v1211 = vunpack.c.l.b16 %v526
        %v1212 = vunpack.c.l.b16 %v527
        %v1213 = vunpack.c.l.b16 %v528
        %v1214 = vunpack.c.l.b16 %v529
        %v1215 = vunpack.c.l.b16 %v530
        %v1216 = vunpack.c.l.b16 %v531
        %v1217 = vunpack.c.l.b16 %v532
        %v1218 = vunpack.c.l.b16 %v533
        %v1219 = vunpack.c.l.b16 %v534
        %v1220 = vunpack.c.l.b16 %v535
        %v1221 = vunpack.c.l.b16 %v536
        %v1222 = vunpack.c.l.b16 %v537
        %v1223 = vunpack.c.l.b16 %v538
        %v1224 = vunpack.c.l.b16 %v539
        %v1225 = vunpack.c.l.b16 %v540
        %v1226 = vunpack.c.l.b16 %v541
        %v1227 = vpack.c.b16 %v1212, %v1211
        %v1228 = vpack.c.b16 %v1214, %v1213
        %v1229 = vpack.c.b16 %v1216, %v1215
        %v1230 = vpack.c.b16 %v1218, %v1217
        %v1231 = vpack.c.b16 %v1220, %v1219
        %v1232 = vpack.c.b16 %v1222, %v1221
        %v1233 = vpack.c.b16 %v1224, %v1223
        %v1234 = vpack.c.b16 %v1226, %v1225
        %1243 = vmatprep.subr.bf16.mxu0 0
        %1244 = vmatpush1.bf16.msra.mxu0 %v1227
        %1245 = vmatprep.subr.bf16.mxu0 0
        %1246 = vmatpush1.bf16.msra.mxu0 %v1228
        %1247 = vmatprep.subr.bf16.mxu0 0
        %1248 = vmatpush1.bf16.msra.mxu0 %v1229
        %1249 = vmatprep.subr.bf16.mxu0 0
        %1250 = vmatpush1.bf16.msra.mxu0 %v1230
        %1251 = vmatprep.subr.bf16.mxu0 0
        %1252 = vmatpush1.bf16.msra.mxu0 %v1231
        %1253 = vmatprep.subr.bf16.mxu0 0
        %1254 = vmatpush1.bf16.msra.mxu0 %v1232
        %1255 = vmatprep.subr.bf16.mxu0 0
        %1256 = vmatpush1.bf16.msra.mxu0 %v1233
        %1257 = vmatprep.subr.bf16.mxu0 0
        %1258 = vmatpush1.bf16.msra.mxu0 %v1234
        %1259 = vmatprep.subr.bf16.mxu0 0
        %1260 = vmatpush1.bf16.msra.mxu0 0
        %1261 = vmatprep.subr.bf16.mxu0 0
        %1262 = vmatpush1.bf16.msra.mxu0 0
        %1263 = vmatprep.subr.bf16.mxu0 0
        %1264 = vmatpush1.bf16.msra.mxu0 0
        %1265 = vmatprep.subr.bf16.mxu0 0
        %1266 = vmatpush1.bf16.msra.mxu0 0
        %1267 = vmatprep.subr.bf16.mxu0 0
        %1268 = vmatpush1.bf16.msra.mxu0 0
        %1269 = vmatprep.subr.bf16.mxu0 0
        %1270 = vmatpush1.bf16.msra.mxu0 0
        %1271 = vmatprep.subr.bf16.mxu0 0
        %1272 = vmatpush1.bf16.msra.mxu0 0
        %1273 = vmatprep.subr.bf16.mxu0 0
        %1274 = vmatpush1.bf16.msra.mxu0 0
        %1275 = vmatprep.mubr.bf16.mxu0 0
        %1276 = vmatmul.mubr.bf16.gmra.mrb[0].mxu0 %v1194
        %v1277 = vpop.f32.mrb[0].mxu0
        %v1278 = vadd.f32 %v1079, %v1277
        %v1279 = vpop.f32.mrb[0].mxu0
        %v1280 = vpop.f32.mrb[0].mxu0
        %v1281 = vadd.f32 %v1082, %v1280
        %v1282 = vpop.f32.mrb[0].mxu0
        %1283 = vdwg.mxu0
        %1284 = vst.msk [vmem:[%s379] sm:$0xff] %vm390, %v1278
        %1285 = vst.msk [vmem:[%s379 + $0x8] sm:$0xff] %vm390, %v1281
        %s1286 = sand.u32 %s269, 1
        %s1287 = scalar_lea.sflag [#allocation4], %s1286
        %s1288 = sand.u32 %s269, 1
        %s1289 = smul.addr %s1288, 16
        %s1290 = scalar_lea.vmem [#allocation3], %s1289
        // Predicated region
        $region65: #{tpu_custom_call.1} parent=63 // pred_check
          %p1291 = pneg %p279
        $region66: #{tpu_custom_call.1} parent=63 // pred_check_branch
          %1293 = sbr.rel (%p1291) target = $region68
        $region67: #{tpu_custom_call.1} parent=63 // pred_region
          %s1295 = ssub.s32 256, 256
          %1296 = vsyncadd %s1287, %s1295
          %s1297 = smul.addr %s25, 2
          %s1298 = smul.addr %s1297, 128
          %s1299 = scalar_lea.hbm %s11, %s1298
          %s1300 = sshll.u32 %s1290, 4
          %s1301 = int_to_ptr.vmem [resolvable:$true] %s1300
          %1306 = dma.vmem_to_hbm [thread:$0]  %s1301, 256, %s1299, %s1287, 128, 128, 8
        $region68: #{tpu_custom_call.1} parent=63 // pred_fallthru
          _
      $region64: #{tpu_custom_call.1} parent=5 // pred_fallthru
        _
      %p1307 = scmp.le.s32.totalorder 2, %s20
      // Predicated region
      $region69: #{tpu_custom_call.1} parent=5 // pred_check
        %p1308 = pneg %p1307
      $region70: #{tpu_custom_call.1} parent=5 // pred_check_branch
        %1310 = sbr.rel (%p1308) target = $region72
      $region71: #{tpu_custom_call.1} parent=5 // pred_region
        %s1311 = ssub.s32 %s20, 2
        // Predicated region
        $region73: #{tpu_custom_call.1} parent=71 // pred_check
          %p1312 = pneg %p285
        $region74: #{tpu_custom_call.1} parent=71 // pred_check_branch
          %1314 = sbr.rel (%p1312) target = $region76
        $region75: #{tpu_custom_call.1} parent=71 // pred_region
          %s1315 = sand.u32 %s270, 1
          %s1316 = scalar_lea.sflag [#allocation4], %s1315
          %s1317 = sand.u32 %s270, 1
          %s1318 = smul.addr %s1317, 16
          %s1319 = scalar_lea.vmem [#allocation3], %s1318
          %1320 = dma.done %s1316, 256
        $region76: #{tpu_custom_call.1} parent=71 // pred_fallthru
          _
      $region72: #{tpu_custom_call.1} parent=5 // pred_fallthru
        _
    $region6: #{tpu_custom_call.1} parent=1 // loop_footer
      %s24 = sadd.s32 1, %s20
    $region7: #{tpu_custom_call.1} parent=1 // loop_footer_branch
      %19 = sbr.rel target = $region3
    $region8: #{tpu_custom_call.1} parent=1 // loop_exit
      _
    %1321 = vsyncpa [#allocation4], 1
    %s1322 = scalar_lea.sflag [#allocation4], 1
    %1323 = vsyncpa %s1322, 1

</llo_original>
